<compile_context>
chip_gen: v7x
topology: tpu7x:2x2x1
jax: 0.10.0
libtpu: 0.0.40
codegen_flags: <defaults>
</compile_context>

<pallas_src>
import math
from functools import lru_cache, partial

import jax
import jax.numpy as jnp
from jax import lax
from jax.experimental import pallas as pl
from jax.experimental.pallas import tpu as pltpu

NEG_BIG = -1e30          # finite mask value (avoids inf - inf -> NaN)
LANE = 128
SUBLANE = 8


def _round_up(n, m):
    return ((n + m - 1) // m) * m


@lru_cache(maxsize=1)
def _vmem_limit_bytes():
    """Scoped-VMEM budget: ~half of physical, clamped to [32, 96] MiB (safe on v5e/v6e/v7x)."""
    cap = 64 * 1024 * 1024
    try:
        cap = int(pltpu.get_tpu_info().vmem_capacity_bytes)
    except Exception:
        pass
    return max(32 * 1024 * 1024, min(cap // 2, 96 * 1024 * 1024))


def _pick_div_tile(n, candidates, fits=lambda c: True):
    """Largest candidate dividing n that satisfies fits(); smallest divisor if none fits;
    the full extent if nothing divides."""
    divisors = [c for c in candidates if n % c == 0]
    if not divisors:
        return n
    for c in divisors:                 # candidates are descending
        if fits(c):
            return c
    return divisors[-1]


def _seq_tile(s):
    """Largest sequence tile whose zero-padding overhead stays <= ~1/8 of the sequence."""
    limit = (_round_up(max(s, 1), SUBLANE) * 9) // 8
    for c in (512, 256, 128, 64, 32, 16, 8):
        if _round_up(s, c) <= limit:
            return c
    return SUBLANE


# ---------------------------------------------------------------------------
# Generic fused linear kernel: y = x @ W + b (fp32 accumulation on the MXU)
# ---------------------------------------------------------------------------
def _linear_kernel(x_ref, w_ref, b_ref, o_ref):
    acc = jnp.dot(x_ref[...], w_ref[...], preferred_element_type=jnp.float32)
    o_ref[...] = (acc + b_ref[...].astype(jnp.float32)).astype(o_ref.dtype)


def _linear(x2d, w, b):
    """y = x2d @ w + b, tiled over rows and output columns."""
    R, Din = x2d.shape
    Dout = w.shape[1]
    vmem = _vmem_limit_bytes()
    budget = vmem // 4               # per double-buffered operand
    tm = _pick_div_tile(R, (512, 256, 128, 64, 32, 16, 8),
                        fits=lambda c: 2 * c * Din * x2d.dtype.itemsize <= budget)
    tn = _pick_div_tile(Dout, (1024, 512, 256, 128),
                        fits=lambda c: 2 * Din * c * w.dtype.itemsize <= budget)
    # TODO(synk): add a Din-reduction grid axis (fp32 scratch accumulator) if Din ever gets
    #             large enough that a (tm, Din)/(Din, tn) block no longer fits the budget.
    grid = (R // tm, Dout // tn)

    cost = pl.CostEstimate(
        flops=2 * R * Din * Dout,
        transcendentals=0,
        bytes_accessed=int(x2d.size * x2d.dtype.itemsize + w.size * w.dtype.itemsize
                           + b.size * b.dtype.itemsize + R * Dout * x2d.dtype.itemsize),
    )

    return pl.pallas_call(
        _linear_kernel,
        out_shape=jax.ShapeDtypeStruct((R, Dout), x2d.dtype),
        grid_spec=pltpu.PrefetchScalarGridSpec(
            num_scalar_prefetch=0,
            grid=grid,
            in_specs=[
                # x tile is resident across the inner Dout sweep (index constant in j).
                pl.BlockSpec((tm, Din), lambda i, j: (i, 0)),
                pl.BlockSpec((Din, tn), lambda i, j: (0, j)),
                pl.BlockSpec((1, tn), lambda i, j: (0, j)),
            ],
            out_specs=pl.BlockSpec((tm, tn), lambda i, j: (i, j)),
        ),
        compiler_params=pltpu.CompilerParams(
            dimension_semantics=("parallel", "parallel"),
            vmem_limit_bytes=vmem,
        ),
        cost_estimate=cost,
    )(x2d, w, b)


# ---------------------------------------------------------------------------
# Flash-attention kernel: grid = (B, H, q_tiles, kv_tiles)
# Heads are selected via the BlockSpec column-block index into the fused qkv buffer;
# Q is already scaled by 1/sqrt(d_k) (folded into the projection weights).
# ---------------------------------------------------------------------------
def _flash_kernel(q_ref, k_ref, v_ref, o_ref, m_sc, l_sc, acc_sc, *,
                  tq, tkv, kv_len, causal, need_kv_mask, mxu_bf16):
    qi = pl.program_id(2)
    ki = pl.program_id(3)

    @pl.when(ki == 0)
    def _init():
        m_sc[...] = jnp.full_like(m_sc, NEG_BIG)
        l_sc[...] = jnp.zeros_like(l_sc)
        acc_sc[...] = jnp.zeros_like(acc_sc)

    first_q = qi * tq
    last_q = first_q + (tq - 1)
    first_k = ki * tkv
    last_k = first_k + (tkv - 1)

    def _accumulate(masked):
        q = q_ref[0]          # (tq, hdp)
        k = k_ref[0]          # (tkv, hdp)
        v = v_ref[0]          # (tkv, hdp)
        if mxu_bf16 and q.dtype != jnp.bfloat16:
            q = q.astype(jnp.bfloat16)
            k = k.astype(jnp.bfloat16)
            v = v.astype(jnp.bfloat16)
        # Contract the shared last dim directly on the MXU (no materialized transpose).
        s = lax.dot_general(q, k, (((1,), (1,)), ((), ())),
                            preferred_element_type=jnp.float32)      # (tq, tkv)
        if masked:
            col = first_k + lax.broadcasted_iota(jnp.int32, (tq, tkv), 1)
            keep = None
            if causal:
                row = first_q + lax.broadcasted_iota(jnp.int32, (tq, tkv), 0)
                keep = col <= row
            if need_kv_mask:
                kv_ok = col < kv_len
                keep = kv_ok if keep is None else jnp.logical_and(keep, kv_ok)
            s = jnp.where(keep, s, NEG_BIG)

        m_prev = m_sc[...]
        m_new = jnp.maximum(m_prev, jnp.max(s, axis=-1, keepdims=True))
        alpha = jnp.exp(m_prev - m_new)
        p = jnp.exp(s - m_new)
        l_sc[...] = alpha * l_sc[...] + jnp.sum(p, axis=-1, keepdims=True)
        acc_sc[...] = alpha * acc_sc[...] + jnp.dot(
            p.astype(v.dtype), v, preferred_element_type=jnp.float32)
        m_sc[...] = m_new

    if not (causal or need_kv_mask):
        _accumulate(masked=False)
    else:
        if causal:
            visible = first_k <= last_q          # tile has at least one unmasked entry
            fully_visible = last_k <= first_q    # strictly at/below the diagonal
        else:
            visible = jnp.bool_(True)
            fully_visible = jnp.bool_(True)
        if need_kv_mask:
            fully_visible = jnp.logical_and(fully_visible, last_k < kv_len)

        # Interior (fully visible) tiles skip the iota/compare/select VALU work entirely.
        @pl.when(jnp.logical_and(visible, fully_visible))
        def _():
            _accumulate(masked=False)

        @pl.when(jnp.logical_and(visible, jnp.logical_not(fully_visible)))
        def _():
            _accumulate(masked=True)

    @pl.when(ki == pl.num_programs(3) - 1)
    def _finalize():
        # Exact division: runs once per Q tile, so its cost is negligible.
        # TODO(synk): guard l==0 (jnp.maximum(l, tiny)) if padding/segment masks that can
        #             fully mask a query row are ever added; causal + kv-length masks cannot.
        o_ref[0] = (acc_sc[...] / l_sc[...]).astype(o_ref.dtype)


def _flash_attention(qkv, *, num_heads, head_dim_padded, seq_len, causal, seq_tile, mxu_bf16):
    B, s_pad, width = qkv.shape
    H, hdp = num_heads, head_dim_padded
    assert width == 3 * H * hdp
    tq = tkv = seq_tile
    nq, nk = s_pad // tq, s_pad // tkv
    need_kv_mask = (s_pad != seq_len)
    vmem = _vmem_limit_bytes()

    def q_map(b, h, qi, ki):
        return (b, qi, h)

    if causal:
        # Clamp the kv block index for tiles strictly above the diagonal: the block index
        # repeats, so Pallas skips the (otherwise wasted) K/V DMA for fully-masked tiles.
        def _kv_block(qi, ki):
            return jnp.minimum(ki, (qi * tq + (tq - 1)) // tkv)
    else:
        def _kv_block(qi, ki):
            return ki

    def k_map(b, h, qi, ki):
        return (b, _kv_block(qi, ki), H + h)

    def v_map(b, h, qi, ki):
        return (b, _kv_block(qi, ki), 2 * H + h)

    def o_map(b, h, qi, ki):
        return (b, qi, h)

    kernel = partial(_flash_kernel, tq=tq, tkv=tkv, kv_len=seq_len, causal=causal,
                     need_kv_mask=need_kv_mask, mxu_bf16=mxu_bf16)

    cost = pl.CostEstimate(
        flops=int(4 * B * H * s_pad * s_pad * hdp),
        transcendentals=int(B * H * s_pad * s_pad),
        bytes_accessed=int(qkv.size * qkv.dtype.itemsize
                           + B * s_pad * H * hdp * qkv.dtype.itemsize),
    )

    # TODO(synk): if profiling shows exposed DMA latency on small K/V tiles, add
    #             pipeline_mode=pl.Buffered(3) to the K and V BlockSpecs below.
    return pl.pallas_call(
        kernel,
        out_shape=jax.ShapeDtypeStruct((B, s_pad, H * hdp), qkv.dtype),
        grid_spec=pltpu.PrefetchScalarGridSpec(
            num_scalar_prefetch=0,
            grid=(B, H, nq, nk),
            in_specs=[
                pl.BlockSpec((1, tq, hdp), q_map),    # Q head-block of the fused qkv buffer
                pl.BlockSpec((1, tkv, hdp), k_map),   # K head-block
                pl.BlockSpec((1, tkv, hdp), v_map),   # V head-block
            ],
            out_specs=pl.BlockSpec((1, tq, hdp), o_map),
            scratch_shapes=[
                pltpu.VMEM((tq, 1), jnp.float32),     # running max
                pltpu.VMEM((tq, 1), jnp.float32),     # running denominator
                pltpu.VMEM((tq, hdp), jnp.float32),   # fp32 output accumulator
            ],
        ),
        compiler_params=pltpu.CompilerParams(
            dimension_semantics=("parallel", "parallel", "parallel", "arbitrary"),
            vmem_limit_bytes=vmem,
        ),
        cost_estimate=cost,
    )(qkv, qkv, qkv)


# ---------------------------------------------------------------------------
# One-time parameter preparation (outside the per-call jit)
# ---------------------------------------------------------------------------
def prepare_mha_params(params, num_heads):
    """Fuse Q/K/V into one lane-padded per-head-blocked weight (scale folded into Q) and
    pad the output projection to match.  Runs once; no per-call HBM pass over the weights."""
    wq, bq, wk, bk, wv, bv, wo, bo = params
    d_model = wq.shape[0]
    dim_q, dim_k, dim_v = wq.shape[1], wk.shape[1], wv.shape[1]
    H = num_heads
    if not (dim_q % H == 0 and dim_k % H == 0 and dim_v % H == 0):
        raise ValueError("Total dimensions for Q, K, V must be divisible by num_heads.")
    hq, hk, hv = dim_q // H, dim_k // H, dim_v // H
    if hq != hk:
        raise ValueError("Per-head query/key sizes must match for Q @ K^T.")
    hdp = _round_up(max(hq, hv), LANE)         # lane-dense per-head block width
    scale = 1.0 / math.sqrt(hk)

    def pad_head_cols(w, hd, s=1.0):
        din = w.shape[0]
        w3 = (w.astype(jnp.float32) * s).astype(w.dtype)       # scale applied in fp32
        w3 = w3.reshape(din, H, hd)
        w3 = jnp.pad(w3, ((0, 0), (0, 0), (0, hdp - hd)))
        return w3.reshape(din, H * hdp)

    w_qkv = jnp.concatenate(
        [pad_head_cols(wq, hq, scale), pad_head_cols(wk, hk), pad_head_cols(wv, hv)], axis=1)
    b_qkv = jnp.concatenate(
        [pad_head_cols(bq, hq, scale), pad_head_cols(bk, hk), pad_head_cols(bv, hv)], axis=1)

    # Rows facing the V padding columns are zero (those attention-output columns are exactly 0).
    wo_pad = jnp.pad(wo.reshape(H, hv, d_model),
                     ((0, 0), (0, hdp - hv), (0, 0))).reshape(H * hdp, d_model)

    fused = (w_qkv, b_qkv, wo_pad, bo)
    return fused, hdp


# ---------------------------------------------------------------------------
# Full forward pass
# ---------------------------------------------------------------------------
@partial(jax.jit,
         static_argnames=("num_heads", "head_dim_padded", "causal_mask", "attn_operands_bf16"))
def multi_head_attention(x, fused_params, *, num_heads, head_dim_padded,
                         causal_mask=False, attn_operands_bf16=False):
    """x: (B, S, d_model); fused_params from prepare_mha_params()."""
    B, S, D = x.shape
    w_qkv, b_qkv, wo_pad, bo = fused_params
    H, hdp = num_heads, head_dim_padded

    seq_tile = _seq_tile(S)
    s_pad = _round_up(S, seq_tile)
    if s_pad != S:
        x = jnp.pad(x, ((0, 0), (0, s_pad - S), (0, 0)))

    # 1) One wide fused QKV projection GEMM; per-head column blocks are already lane-padded,
    #    so no further slicing / transposing of activations is ever needed.
    qkv = _linear(x.reshape(B * s_pad, D), w_qkv, b_qkv)
    qkv = qkv.reshape(B, s_pad, 3 * H * hdp)           # free row-major reshape

    # 2) Flash attention: head axis lives on the grid, selected via index_map column blocks.
    attn = _flash_attention(qkv, num_heads=H, head_dim_padded=hdp, seq_len=S,
                            causal=causal_mask, seq_tile=seq_tile,
                            mxu_bf16=attn_operands_bf16)   # (B, s_pad, H*hdp)

    # 3) Output projection straight from the padded head-concatenated layout.
    out = _linear(attn.reshape(B * s_pad, H * hdp), wo_pad, bo)
    out = out.reshape(B, s_pad, D)
    if s_pad != S:
        out = out[:, :S, :]
    return out


# ---------------------------------------------------------------------------
# Pure-JAX reference mirroring the PyTorch forward pass
# ---------------------------------------------------------------------------
def mha_reference(x, params, *, num_heads, causal_mask=False):
    wq, bq, wk, bk, wv, bv, wo, bo = params
    q = x @ wq + bq
    k = x @ wk + bk
    v = x @ wv + bv
    S = x.shape[1]
    H = num_heads
    hq = q.shape[-1] // H
    hk = k.shape[-1] // H
    hv = v.shape[-1] // H
    heads = []
    for h in range(H):
        qh = q[:, :, h * hq:(h + 1) * hq]
        kh = k[:, :, h * hk:(h + 1) * hk]
        vh = v[:, :, h * hv:(h + 1) * hv]
        s = jnp.einsum("bqd,bkd->bqk", qh, kh) / jnp.sqrt(jnp.float32(hk))
        if causal_mask:
            mask = jnp.tril(jnp.ones((S, S), dtype=bool))
            s = jnp.where(mask[None], s, -jnp.inf)
        p = jax.nn.softmax(s, axis=-1)
        heads.append(jnp.einsum("bqk,bkd->bqd", p, vh))
    return jnp.concatenate(heads, axis=-1) @ wo + bo


def init_params(key, d_model, dim_q, dim_k, dim_v, dtype=jnp.float32):
    ks = jax.random.split(key, 8)

    def w(k, shape):
        return (0.1 * jax.random.normal(k, shape)).astype(dtype)

    wq = w(ks[0], (d_model, dim_q)); bq = w(ks[1], (1, dim_q))
    wk = w(ks[2], (d_model, dim_k)); bk = w(ks[3], (1, dim_k))
    wv = w(ks[4], (d_model, dim_v)); bv = w(ks[5], (1, dim_v))
    wo = w(ks[6], (dim_v, d_model)); bo = w(ks[7], (1, d_model))
    return (wq, bq, wk, bk, wv, bv, wo, bo)


if __name__ == "__main__":
    B, S, d_model, num_heads = 2, 8, 32, 4

    root = jax.random.PRNGKey(0)
    kx, kx2, kp = jax.random.split(root, 3)
    x = jax.random.normal(kx, (B, S, d_model), dtype=jnp.float32)
    params = init_params(kp, d_model, d_model, d_model, d_model)
    fused, hdp = prepare_mha_params(params, num_heads)

    # fp32, divisible sequence, causal off / on.
    for causal in (False, True):
        out = jax.block_until_ready(
            multi_head_attention(x, fused, num_heads=num_heads, head_dim_padded=hdp,
                                 causal_mask=causal))
        ref = mha_reference(x, params, num_heads=num_heads, causal_mask=causal)
        assert out.shape == (B, S, d_model)
        assert jnp.allclose(out, ref, atol=5e-3, rtol=5e-3), f"fp32 mismatch (causal={causal})"

    # Ragged sequence (S=11 -> padded to 16): exercises padding + in-kernel kv-length mask.
    x_ragged = jax.random.normal(kx2, (B, 11, d_model), dtype=jnp.float32)
    out_r = jax.block_until_ready(
        multi_head_attention(x_ragged, fused, num_heads=num_heads, head_dim_padded=hdp,
                             causal_mask=True))
    ref_r = mha_reference(x_ragged, params, num_heads=num_heads, causal_mask=True)
    assert out_r.shape == (B, 11, d_model)
    assert jnp.allclose(out_r, ref_r, atol=5e-3, rtol=5e-3), "fp32 ragged-S mismatch"

    # bf16 MXU operands (v6e/v7x recommendation) with fp32 accumulation / fp32 softmax state.
    out_b = jax.block_until_ready(
        multi_head_attention(x, fused, num_heads=num_heads, head_dim_padded=hdp,
                             causal_mask=True, attn_operands_bf16=True))
    ref_c = mha_reference(x, params, num_heads=num_heads, causal_mask=True)
    assert jnp.allclose(out_b, ref_c, atol=2e-2, rtol=2e-2), "bf16-operand mismatch"

    print("KERNEL_OK")
</pallas_src>

<mosaic_0001>
module attributes {stable_mosaic.version = 11 : i64} {
  func.func @_flash_kernel(%arg0: i32, %arg1: i32, %arg2: i32, %arg3: i32, %arg4: memref<1x8x128xf32, #tpu.memory_space<vmem>>, %arg5: memref<1x8x128xf32, #tpu.memory_space<vmem>>, %arg6: memref<1x8x128xf32, #tpu.memory_space<vmem>>, %arg7: memref<1x8x128xf32, #tpu.memory_space<vmem>>, %arg8: memref<8x1xf32, #tpu.memory_space<vmem>>, %arg9: memref<8x1xf32, #tpu.memory_space<vmem>>, %arg10: memref<8x128xf32, #tpu.memory_space<vmem>>) attributes {dimension_semantics = [#tpu.dimension_semantics<parallel>, #tpu.dimension_semantics<parallel>, #tpu.dimension_semantics<parallel>, #tpu.dimension_semantics<arbitrary>], iteration_bounds = array<i64: 2, 4, 1, 1>, scalar_prefetch = 0 : i64, scratch_operands = 3 : i64, tpu.core_type = #tpu.core_type<tc>, window_params = [{transform_indices = @transform_0, window_bounds = array<i64: 1, 8, 128>}, {transform_indices = @transform_1, window_bounds = array<i64: 1, 8, 128>}, {transform_indices = @transform_2, window_bounds = array<i64: 1, 8, 128>}, {transform_indices = @transform_3, window_bounds = array<i64: 1, 8, 128>}]} {
    %c0_i32 = arith.constant 0 : i32
    %0 = arith.cmpi eq, %arg3, %c0_i32 : i32
    %1 = arith.extui %0 : i1 to i32
    %c0_i32_0 = arith.constant 0 : i32
    %2 = arith.cmpi ne, %1, %c0_i32_0 : i32
    scf.if %2 {
      %cst_26 = arith.constant -1.000000e+30 : f32
      %35 = vector.broadcast %cst_26 : f32 to vector<8x1xf32>
      %c0_27 = arith.constant 0 : index
      %c0_28 = arith.constant 0 : index
      %36 = vector.load %arg8[%c0_27, %c0_28] : memref<8x1xf32, #tpu.memory_space<vmem>>, vector<8x1xf32>
      tpu.vector_store %arg8[%c0_27, %c0_28], %35 {strides = array<i32>} : memref<8x1xf32, #tpu.memory_space<vmem>>, vector<8x1xf32>,
      %cst_29 = arith.constant 0.000000e+00 : f32
      %37 = vector.broadcast %cst_29 : f32 to vector<8x1xf32>
      %c0_30 = arith.constant 0 : index
      %c0_31 = arith.constant 0 : index
      %38 = vector.load %arg9[%c0_30, %c0_31] : memref<8x1xf32, #tpu.memory_space<vmem>>, vector<8x1xf32>
      tpu.vector_store %arg9[%c0_30, %c0_31], %37 {strides = array<i32>} : memref<8x1xf32, #tpu.memory_space<vmem>>, vector<8x1xf32>,
      %cst_32 = arith.constant 0.000000e+00 : f32
      %39 = vector.broadcast %cst_32 : f32 to vector<8x128xf32>
      %c0_33 = arith.constant 0 : index
      %c0_34 = arith.constant 0 : index
      %40 = vector.load %arg10[%c0_33, %c0_34] : memref<8x128xf32, #tpu.memory_space<vmem>>, vector<8x128xf32>
      tpu.vector_store %arg10[%c0_33, %c0_34], %39 {strides = array<i32>} : memref<8x128xf32, #tpu.memory_space<vmem>>, vector<8x128xf32>,
    } else {
    }
    %c0 = arith.constant 0 : index
    %c0_1 = arith.constant 0 : index
    %c0_2 = arith.constant 0 : index
    %3 = vector.load %arg4[%c0, %c0_1, %c0_2] : memref<1x8x128xf32, #tpu.memory_space<vmem>>, vector<1x8x128xf32>
    %4 = vector.shape_cast %3 : vector<1x8x128xf32> to vector<8x128xf32>
    %c0_3 = arith.constant 0 : index
    %c0_4 = arith.constant 0 : index
    %c0_5 = arith.constant 0 : index
    %5 = vector.load %arg5[%c0_3, %c0_4, %c0_5] : memref<1x8x128xf32, #tpu.memory_space<vmem>>, vector<1x8x128xf32>
    %6 = vector.shape_cast %5 : vector<1x8x128xf32> to vector<8x128xf32>
    %c0_6 = arith.constant 0 : index
    %c0_7 = arith.constant 0 : index
    %c0_8 = arith.constant 0 : index
    %7 = vector.load %arg6[%c0_6, %c0_7, %c0_8] : memref<1x8x128xf32, #tpu.memory_space<vmem>>, vector<1x8x128xf32>
    %8 = vector.shape_cast %7 : vector<1x8x128xf32> to vector<8x128xf32>
    %cst = arith.constant dense<0.000000e+00> : vector<8x8xf32>
    %9 = tpu.matmul %4, %6, %cst {dimension_numbers = #tpu.dot_dimension_numbers<[1], [1], [0], [0], [0, 0, 1, 0], [], []>} : vector<8x128xf32>, vector<8x128xf32>, vector<8x8xf32> -> vector<8x8xf32>
    %c0_9 = arith.constant 0 : index
    %c0_10 = arith.constant 0 : index
    %10 = vector.load %arg8[%c0_9, %c0_10] : memref<8x1xf32, #tpu.memory_space<vmem>>, vector<8x1xf32>
    %cst_11 = arith.constant dense<0xFF800000> : vector<8xf32>
    %11 = vector.multi_reduction <maximumf>, %9, %cst_11 [1] : vector<8x8xf32> to vector<8xf32>
    %12 = vector.shape_cast %11 : vector<8xf32> to vector<8x1xf32>
    %13 = arith.maximumf %10, %12 : vector<8x1xf32>
    %14 = arith.subf %10, %13 : vector<8x1xf32>
    %15 = math.exp %14 : vector<8x1xf32>
    %16 = vector.broadcast %13 : vector<8x1xf32> to vector<8x8xf32>
    %17 = arith.subf %9, %16 : vector<8x8xf32>
    %18 = math.exp %17 : vector<8x8xf32>
    %c0_12 = arith.constant 0 : index
    %c0_13 = arith.constant 0 : index
    %19 = vector.load %arg9[%c0_12, %c0_13] : memref<8x1xf32, #tpu.memory_space<vmem>>, vector<8x1xf32>
    %20 = arith.mulf %15, %19 : vector<8x1xf32>
    %cst_14 = arith.constant dense<0.000000e+00> : vector<8xf32>
    %21 = vector.multi_reduction <add>, %18, %cst_14 [1] : vector<8x8xf32> to vector<8xf32>
    %22 = vector.shape_cast %21 : vector<8xf32> to vector<8x1xf32>
    %23 = arith.addf %20, %22 : vector<8x1xf32>
    %c0_15 = arith.constant 0 : index
    %c0_16 = arith.constant 0 : index
    %24 = vector.load %arg9[%c0_15, %c0_16] : memref<8x1xf32, #tpu.memory_space<vmem>>, vector<8x1xf32>
    tpu.vector_store %arg9[%c0_15, %c0_16], %23 {strides = array<i32>} : memref<8x1xf32, #tpu.memory_space<vmem>>, vector<8x1xf32>,
    %c0_17 = arith.constant 0 : index
    %c0_18 = arith.constant 0 : index
    %25 = vector.load %arg10[%c0_17, %c0_18] : memref<8x128xf32, #tpu.memory_space<vmem>>, vector<8x128xf32>
    %26 = vector.broadcast %15 : vector<8x1xf32> to vector<8x128xf32>
    %27 = arith.mulf %26, %25 : vector<8x128xf32>
    %cst_19 = arith.constant dense<0.000000e+00> : vector<8x128xf32>
    %28 = tpu.matmul %18, %8, %cst_19 {dimension_numbers = #tpu.dot_dimension_numbers<[1], [0], [0], [1], [0, 0, 1, 1], [], []>} : vector<8x8xf32>, vector<8x128xf32>, vector<8x128xf32> -> vector<8x128xf32>
    %29 = arith.addf %27, %28 : vector<8x128xf32>
    %c0_20 = arith.constant 0 : index
    %c0_21 = arith.constant 0 : index
    %30 = vector.load %arg10[%c0_20, %c0_21] : memref<8x128xf32, #tpu.memory_space<vmem>>, vector<8x128xf32>
    tpu.vector_store %arg10[%c0_20, %c0_21], %29 {strides = array<i32>} : memref<8x128xf32, #tpu.memory_space<vmem>>, vector<8x128xf32>,
    %c0_22 = arith.constant 0 : index
    %c0_23 = arith.constant 0 : index
    %31 = vector.load %arg8[%c0_22, %c0_23] : memref<8x1xf32, #tpu.memory_space<vmem>>, vector<8x1xf32>
    tpu.vector_store %arg8[%c0_22, %c0_23], %13 {strides = array<i32>} : memref<8x1xf32, #tpu.memory_space<vmem>>, vector<8x1xf32>,
    %c0_i32_24 = arith.constant 0 : i32
    %32 = arith.cmpi eq, %arg3, %c0_i32_24 : i32
    %33 = arith.extui %32 : i1 to i32
    %c0_i32_25 = arith.constant 0 : i32
    %34 = arith.cmpi ne, %33, %c0_i32_25 : i32
    scf.if %34 {
      %c0_26 = arith.constant 0 : index
      %c0_27 = arith.constant 0 : index
      %35 = vector.load %arg10[%c0_26, %c0_27] : memref<8x128xf32, #tpu.memory_space<vmem>>, vector<8x128xf32>
      %c0_28 = arith.constant 0 : index
      %c0_29 = arith.constant 0 : index
      %36 = vector.load %arg9[%c0_28, %c0_29] : memref<8x1xf32, #tpu.memory_space<vmem>>, vector<8x1xf32>
      %37 = vector.broadcast %36 : vector<8x1xf32> to vector<8x128xf32>
      %38 = arith.divf %35, %37 : vector<8x128xf32>
      %c0_30 = arith.constant 0 : index
      %c0_31 = arith.constant 0 : index
      %c0_32 = arith.constant 0 : index
      %39 = vector.load %arg7[%c0_30, %c0_31, %c0_32] : memref<1x8x128xf32, #tpu.memory_space<vmem>>, vector<1x8x128xf32>
      %40 = vector.shape_cast %39 : vector<1x8x128xf32> to vector<8x128xf32>
      %41 = vector.shape_cast %38 : vector<8x128xf32> to vector<1x8x128xf32>
      tpu.vector_store %arg7[%c0_30, %c0_31, %c0_32], %41 {strides = array<i32>} : memref<1x8x128xf32, #tpu.memory_space<vmem>>, vector<1x8x128xf32>,
    } else {
    }
    return
  }
  func.func @transform_0(%arg0: i32, %arg1: i32, %arg2: i32, %arg3: i32) -> (i32, i32, i32) {
    %c0_i32 = arith.constant 0 : i32
    return %arg0, %arg2, %arg1 : i32, i32, i32
  }
  func.func @transform_1(%arg0: i32, %arg1: i32, %arg2: i32, %arg3: i32) -> (i32, i32, i32) {
    %c4_i32 = arith.constant 4 : i32
    %0 = arith.addi %c4_i32, %arg1 : i32
    %c0_i32 = arith.constant 0 : i32
    return %arg0, %arg3, %0 : i32, i32, i32
  }
  func.func @transform_2(%arg0: i32, %arg1: i32, %arg2: i32, %arg3: i32) -> (i32, i32, i32) {
    %c8_i32 = arith.constant 8 : i32
    %0 = arith.addi %c8_i32, %arg1 : i32
    %c0_i32 = arith.constant 0 : i32
    return %arg0, %arg3, %0 : i32, i32, i32
  }
  func.func @transform_3(%arg0: i32, %arg1: i32, %arg2: i32, %arg3: i32) -> (i32, i32, i32) {
    %c0_i32 = arith.constant 0 : i32
    return %arg0, %arg2, %arg1 : i32, i32, i32
  }
}

module attributes {stable_mosaic.version = 11 : i64} {
  func.func @_linear_kernel(%arg0: i32, %arg1: i32, %arg2: memref<16x32xf32, #tpu.memory_space<vmem>>, %arg3: memref<32x512xf32, #tpu.memory_space<vmem>>, %arg4: memref<1x512xf32, #tpu.memory_space<vmem>>, %arg5: memref<16x512xf32, #tpu.memory_space<vmem>>) attributes {dimension_semantics = [#tpu.dimension_semantics<parallel>, #tpu.dimension_semantics<parallel>], iteration_bounds = array<i64: 1, 3>, scalar_prefetch = 0 : i64, scratch_operands = 0 : i64, tpu.core_type = #tpu.core_type<tc>, window_params = [{transform_indices = @transform_0, window_bounds = array<i64: 16, 32>}, {transform_indices = @transform_1, window_bounds = array<i64: 32, 512>}, {transform_indices = @transform_2, window_bounds = array<i64: 1, 512>}, {transform_indices = @transform_3, window_bounds = array<i64: 16, 512>}]} {
    %c0 = arith.constant 0 : index
    %c0_0 = arith.constant 0 : index
    %0 = vector.load %arg2[%c0, %c0_0] : memref<16x32xf32, #tpu.memory_space<vmem>>, vector<16x32xf32>
    %c0_1 = arith.constant 0 : index
    %c0_2 = arith.constant 0 : index
    %1 = vector.load %arg3[%c0_1, %c0_2] : memref<32x512xf32, #tpu.memory_space<vmem>>, vector<32x512xf32>
    %cst = arith.constant dense<0.000000e+00> : vector<16x512xf32>
    %2 = tpu.matmul %0, %1, %cst {dimension_numbers = #tpu.dot_dimension_numbers<[1], [0], [0], [1], [0, 0, 1, 1], [], []>} : vector<16x32xf32>, vector<32x512xf32>, vector<16x512xf32> -> vector<16x512xf32>
    %c0_3 = arith.constant 0 : index
    %c0_4 = arith.constant 0 : index
    %3 = vector.load %arg4[%c0_3, %c0_4] : memref<1x512xf32, #tpu.memory_space<vmem>>, vector<1x512xf32>
    %4 = vector.broadcast %3 : vector<1x512xf32> to vector<16x512xf32>
    %5 = arith.addf %2, %4 : vector<16x512xf32>
    %c0_5 = arith.constant 0 : index
    %c0_6 = arith.constant 0 : index
    %6 = vector.load %arg5[%c0_5, %c0_6] : memref<16x512xf32, #tpu.memory_space<vmem>>, vector<16x512xf32>
    tpu.vector_store %arg5[%c0_5, %c0_6], %5 {strides = array<i32>} : memref<16x512xf32, #tpu.memory_space<vmem>>, vector<16x512xf32>,
    return
  }
  func.func @transform_0(%arg0: i32, %arg1: i32) -> (i32, i32) {
    %c0_i32 = arith.constant 0 : i32
    %c0_i32_0 = arith.constant 0 : i32
    return %arg0, %c0_i32 : i32, i32
  }
  func.func @transform_1(%arg0: i32, %arg1: i32) -> (i32, i32) {
    %c0_i32 = arith.constant 0 : i32
    %c0_i32_0 = arith.constant 0 : i32
    return %c0_i32, %arg1 : i32, i32
  }
  func.func @transform_2(%arg0: i32, %arg1: i32) -> (i32, i32) {
    %c0_i32 = arith.constant 0 : i32
    %c0_i32_0 = arith.constant 0 : i32
    return %c0_i32, %arg1 : i32, i32
  }
  func.func @transform_3(%arg0: i32, %arg1: i32) -> (i32, i32) {
    %c0_i32 = arith.constant 0 : i32
    return %arg0, %arg1 : i32, i32
  }
}

module attributes {stable_mosaic.version = 11 : i64} {
  func.func @_linear_kernel(%arg0: i32, %arg1: i32, %arg2: memref<16x512xf32, #tpu.memory_space<vmem>>, %arg3: memref<512x32xf32, #tpu.memory_space<vmem>>, %arg4: memref<1x32xf32, #tpu.memory_space<vmem>>, %arg5: memref<16x32xf32, #tpu.memory_space<vmem>>) attributes {dimension_semantics = [#tpu.dimension_semantics<parallel>, #tpu.dimension_semantics<parallel>], iteration_bounds = array<i64: 1, 1>, scalar_prefetch = 0 : i64, scratch_operands = 0 : i64, tpu.core_type = #tpu.core_type<tc>, window_params = [{transform_indices = @transform_0, window_bounds = array<i64: 16, 512>}, {transform_indices = @transform_1, window_bounds = array<i64: 512, 32>}, {transform_indices = @transform_2, window_bounds = array<i64: 1, 32>}, {transform_indices = @transform_3, window_bounds = array<i64: 16, 32>}]} {
    %c0 = arith.constant 0 : index
    %c0_0 = arith.constant 0 : index
    %0 = vector.load %arg2[%c0, %c0_0] : memref<16x512xf32, #tpu.memory_space<vmem>>, vector<16x512xf32>
    %c0_1 = arith.constant 0 : index
    %c0_2 = arith.constant 0 : index
    %1 = vector.load %arg3[%c0_1, %c0_2] : memref<512x32xf32, #tpu.memory_space<vmem>>, vector<512x32xf32>
    %cst = arith.constant dense<0.000000e+00> : vector<16x32xf32>
    %2 = tpu.matmul %0, %1, %cst {dimension_numbers = #tpu.dot_dimension_numbers<[1], [0], [0], [1], [0, 0, 1, 1], [], []>} : vector<16x512xf32>, vector<512x32xf32>, vector<16x32xf32> -> vector<16x32xf32>
    %c0_3 = arith.constant 0 : index
    %c0_4 = arith.constant 0 : index
    %3 = vector.load %arg4[%c0_3, %c0_4] : memref<1x32xf32, #tpu.memory_space<vmem>>, vector<1x32xf32>
    %4 = vector.broadcast %3 : vector<1x32xf32> to vector<16x32xf32>
    %5 = arith.addf %2, %4 : vector<16x32xf32>
    %c0_5 = arith.constant 0 : index
    %c0_6 = arith.constant 0 : index
    %6 = vector.load %arg5[%c0_5, %c0_6] : memref<16x32xf32, #tpu.memory_space<vmem>>, vector<16x32xf32>
    tpu.vector_store %arg5[%c0_5, %c0_6], %5 {strides = array<i32>} : memref<16x32xf32, #tpu.memory_space<vmem>>, vector<16x32xf32>,
    return
  }
  func.func @transform_0(%arg0: i32, %arg1: i32) -> (i32, i32) {
    %c0_i32 = arith.constant 0 : i32
    %c0_i32_0 = arith.constant 0 : i32
    return %arg0, %c0_i32 : i32, i32
  }
  func.func @transform_1(%arg0: i32, %arg1: i32) -> (i32, i32) {
    %c0_i32 = arith.constant 0 : i32
    %c0_i32_0 = arith.constant 0 : i32
    return %c0_i32, %arg1 : i32, i32
  }
  func.func @transform_2(%arg0: i32, %arg1: i32) -> (i32, i32) {
    %c0_i32 = arith.constant 0 : i32
    %c0_i32_0 = arith.constant 0 : i32
    return %c0_i32, %arg1 : i32, i32
  }
  func.func @transform_3(%arg0: i32, %arg1: i32) -> (i32, i32) {
    %c0_i32 = arith.constant 0 : i32
    return %arg0, %arg1 : i32, i32
  }
}

</mosaic_0001>

<llo_original>
// kernel: multi_head_attention.4
$region0: #{multi_head_attention.4}
  #allocation0 [shape = 'u32[]', space=smem, size = 0x4, offset = 0x4, fixed_abs, tag = 'smem constant byte address 0x4 - core index']
  #allocation1 [shape = 'u32[144,128]{1,0:T(1,128)}', space=vmem, size = 0x12000, scoped, tag = 'internal scratch']
  #allocation2 [shape = 'f32[8,1]{1,0:T(8,128)}', space=vmem, size = 0x1000, scoped, tag = 'scratch operand']
  #allocation3 [shape = 'f32[8,1]{1,0:T(8,128)}', space=vmem, size = 0x1000, scoped, tag = 'scratch operand']
  #allocation4 [shape = 'f32[8,128]{1,0:T(8,128)}', space=vmem, size = 0x1000, scoped, tag = 'scratch operand']
  %s0 = inlined_call_operand.vmem [shape: f32[2,8,1536], index: 0, kind: input, shape index: {}, may-alias: {0,1,2}]
  %s1 = inlined_call_operand.vmem [shape: f32[2,8,1536], index: 1, kind: input, shape index: {}, may-alias: {0,1,2}]
  %s2 = inlined_call_operand.vmem [shape: f32[2,8,1536], index: 2, kind: input, shape index: {}, may-alias: {0,1,2}]
  %s3 = inlined_call_operand.vmem [shape: f32[2,8,512], index: 3, kind: output, shape index: {}]
  %s4 = sld [smem:[#allocation0]]
  $region53: #{multi_head_attention.4} parent=0
    _
  %s6 = ssub.s32 1, %s4
  %s7 = scalar_select 0, %s6, %s4
  loop: start=0, step=1, limit=10
  $region2: #{multi_head_attention.4} parent=0 // loop_pre_header
    _
  $region3: #{multi_head_attention.4} parent=0 // loop_header
    %s9 = sphi 0, %s13
    %p10 = scmp.ge.s32.totalorder %s9, 10
    %s16 = sphi 0, %s42
    %s17 = sphi 0, %s38
    %s18 = sphi 0, %s34
    %s19 = sphi 0, %s30
    %s20 = sphi 0, %s16
    %s21 = sphi 0, %s17
    %s22 = sphi 0, %s18
    %s23 = sphi 0, %s19
    %s24 = sphi 0, %s20
    %s25 = sphi 0, %s21
    %s26 = sphi 0, %s22
    %s27 = sphi 0, %s23
    %s49 = sphi 0, %s51
    %s52 = sphi 0, %s49
    %s53 = sphi 0, %s52
    %s69 = sphi 0, %s53
    %s81 = sphi 0, %s83
    %s84 = sphi 0, %s81
    %s85 = sphi 0, %s84
    %s101 = sphi 0, %s85
    %s113 = sphi 0, %s115
    %s116 = sphi 0, %s113
    %s117 = sphi 0, %s116
    %s133 = sphi 0, %s117
    %s143 = sphi 0, %s145
    %s146 = sphi 0, %s143
    %s147 = sphi 0, %s146
    %s163 = sphi 0, %s147
  $region4: #{multi_head_attention.4} parent=0 // loop_header_branch
    %12 = sbr.rel (%p10) target = $region8
  $region5: #{multi_head_attention.4} parent=0 // loop_body
    %s14 = ssub.s32 %s9, 1
    %s15 = ssub.s32 %s9, 2
    %s28 = sadd.s32 1, %s19
    %p29 = scmp.ge.s32.totalorder %s28, 1
    %s30 = scalar_select %p29, 0, %s28
    %s31 = sadd.s32 1, %s18
    %s32 = scalar_select %p29, %s31, %s18
    %p33 = scmp.ge.s32.totalorder %s32, 1
    %s34 = scalar_select %p33, 0, %s32
    %s35 = sadd.s32 1, %s17
    %s36 = scalar_select %p33, %s35, %s17
    %p37 = scmp.ge.s32.totalorder %s36, 4
    %s38 = scalar_select %p37, 0, %s36
    %s39 = sadd.s32 1, %s16
    %s40 = scalar_select %p37, %s39, %s16
    %p41 = scmp.ge.s32.totalorder %s40, 2
    %s42 = scalar_select %p41, 0, %s40
    %s43 = ssub.s32 %s16, %s42
    %s44 = ssub.s32 %s18, %s34
    %s45 = sor.u32 %s43, %s44
    %s46 = ssub.s32 %s17, %s38
    %s47 = sor.u32 %s45, %s46
    %p48 = scmp.eq.s32.totalorder %s47, 0
    %s50 = sadd.s32 %s49, 1
    %s51 = scalar_select %p48, %s49, %s50
    %p54 = pneg %p48
    %p55 = scmp.eq.s32.totalorder %s9, 7
    %p56 = por %p54, %p55
    %p57 = scmp.ne.s32.totalorder %s49, %s52
    %p58 = scmp.eq.s32.totalorder %s9, 0
    %p59 = por %p57, %p58
    %p60 = scmp.ne.s32.totalorder %s49, %s52
    %p61 = scmp.eq.s32.totalorder %s14, 7
    %p62 = por %p60, %p61
    %p63 = scmp.ne.s32.totalorder %s52, %s53
    %p64 = scmp.eq.s32.totalorder %s14, 0
    %p65 = por %p63, %p64
    %p66 = scmp.ne.s32.totalorder %s52, %s53
    %p67 = scmp.eq.s32.totalorder %s15, 7
    %p68 = por %p66, %p67
    %p70 = scmp.ne.s32.totalorder %s53, %s69
    %p71 = scmp.eq.s32.totalorder %s15, 0
    %p72 = por %p70, %p71
    %s73 = sadd.s32 %s17, 4
    %s74 = sadd.s32 %s38, 4
    %s75 = ssub.s32 %s16, %s42
    %s76 = ssub.s32 %s19, %s30
    %s77 = sor.u32 %s75, %s76
    %s78 = ssub.s32 %s73, %s74
    %s79 = sor.u32 %s77, %s78
    %p80 = scmp.eq.s32.totalorder %s79, 0
    %s82 = sadd.s32 %s81, 1
    %s83 = scalar_select %p80, %s81, %s82
    %p86 = pneg %p80
    %p87 = scmp.eq.s32.totalorder %s9, 7
    %p88 = por %p86, %p87
    %p89 = scmp.ne.s32.totalorder %s81, %s84
    %p90 = scmp.eq.s32.totalorder %s9, 0
    %p91 = por %p89, %p90
    %p92 = scmp.ne.s32.totalorder %s81, %s84
    %p93 = scmp.eq.s32.totalorder %s14, 7
    %p94 = por %p92, %p93
    %p95 = scmp.ne.s32.totalorder %s84, %s85
    %p96 = scmp.eq.s32.totalorder %s14, 0
    %p97 = por %p95, %p96
    %p98 = scmp.ne.s32.totalorder %s84, %s85
    %p99 = scmp.eq.s32.totalorder %s15, 7
    %p100 = por %p98, %p99
    %p102 = scmp.ne.s32.totalorder %s85, %s101
    %p103 = scmp.eq.s32.totalorder %s15, 0
    %p104 = por %p102, %p103
    %s105 = sadd.s32 %s17, 8
    %s106 = sadd.s32 %s38, 8
    %s107 = ssub.s32 %s16, %s42
    %s108 = ssub.s32 %s19, %s30
    %s109 = sor.u32 %s107, %s108
    %s110 = ssub.s32 %s105, %s106
    %s111 = sor.u32 %s109, %s110
    %p112 = scmp.eq.s32.totalorder %s111, 0
    %s114 = sadd.s32 %s113, 1
    %s115 = scalar_select %p112, %s113, %s114
    %p118 = pneg %p112
    %p119 = scmp.eq.s32.totalorder %s9, 7
    %p120 = por %p118, %p119
    %p121 = scmp.ne.s32.totalorder %s113, %s116
    %p122 = scmp.eq.s32.totalorder %s9, 0
    %p123 = por %p121, %p122
    %p124 = scmp.ne.s32.totalorder %s113, %s116
    %p125 = scmp.eq.s32.totalorder %s14, 7
    %p126 = por %p124, %p125
    %p127 = scmp.ne.s32.totalorder %s116, %s117
    %p128 = scmp.eq.s32.totalorder %s14, 0
    %p129 = por %p127, %p128
    %p130 = scmp.ne.s32.totalorder %s116, %s117
    %p131 = scmp.eq.s32.totalorder %s15, 7
    %p132 = por %p130, %p131
    %p134 = scmp.ne.s32.totalorder %s117, %s133
    %p135 = scmp.eq.s32.totalorder %s15, 0
    %p136 = por %p134, %p135
    %s137 = ssub.s32 %s16, %s42
    %s138 = ssub.s32 %s18, %s34
    %s139 = sor.u32 %s137, %s138
    %s140 = ssub.s32 %s17, %s38
    %s141 = sor.u32 %s139, %s140
    %p142 = scmp.eq.s32.totalorder %s141, 0
    %s144 = sadd.s32 %s143, 1
    %s145 = scalar_select %p142, %s143, %s144
    %p148 = pneg %p142
    %p149 = scmp.eq.s32.totalorder %s9, 7
    %p150 = por %p148, %p149
    %p151 = scmp.ne.s32.totalorder %s143, %s146
    %p152 = scmp.eq.s32.totalorder %s9, 0
    %p153 = por %p151, %p152
    %p154 = scmp.ne.s32.totalorder %s143, %s146
    %p155 = scmp.eq.s32.totalorder %s14, 7
    %p156 = por %p154, %p155
    %p157 = scmp.ne.s32.totalorder %s146, %s147
    %p158 = scmp.eq.s32.totalorder %s14, 0
    %p159 = por %p157, %p158
    %p160 = scmp.ne.s32.totalorder %s146, %s147
    %p161 = scmp.eq.s32.totalorder %s15, 7
    %p162 = por %p160, %p161
    %p164 = scmp.ne.s32.totalorder %s147, %s163
    %p165 = scmp.eq.s32.totalorder %s15, 0
    %p166 = por %p164, %p165
    %p167 = scmp.le.s32.totalorder 1, %s9
    %p168 = scmp.lt.s32.totalorder %s9, 9
    %p169 = pnand %p167, %p168
    %p170 = pneg %p169
    // Predicated region
    $region9: #{multi_head_attention.4} parent=5 // pred_check
      _
    $region10: #{multi_head_attention.4} parent=5 // pred_check_branch
      %172 = sbr.rel (%p169) target = $region12
    $region11: #{multi_head_attention.4} parent=5 // pred_region
      %s173 = ssub.s32 %s9, 1
    $region12: #{multi_head_attention.4} parent=5 // pred_fallthru
      _
    %p174 = scmp.lt.s32.totalorder %s9, 8
    // Predicated region
    $region13: #{multi_head_attention.4} parent=5 // pred_check
      %p175 = pneg %p174
    $region14: #{multi_head_attention.4} parent=5 // pred_check_branch
      %177 = sbr.rel (%p175) target = $region16
    $region15: #{multi_head_attention.4} parent=5 // pred_region
      // Predicated region
      $region17: #{multi_head_attention.4} parent=15 // pred_check
        %p178 = pneg %p59
      $region18: #{multi_head_attention.4} parent=15 // pred_check_branch
        %180 = sbr.rel (%p178) target = $region20
      $region19: #{multi_head_attention.4} parent=15 // pred_region
        %p181 = scmp.lt.s32.totalorder %s16, 1
        %s182 = scalar_select %p181, %s16, 1
        %p183 = scmp.lt.s32.totalorder %s18, 0
        %s184 = scalar_select %p183, %s18, 0
        %p185 = scmp.lt.s32.totalorder %s17, 11
        %s186 = scalar_select %p185, %s17, 11
        %s187 = smul.addr %s184, 12
        %s188 = sadd.s32 %s186, %s187
        %s189 = smul.addr %s182, 12
        %s190 = sadd.s32 %s188, %s189
        %s191 = smul.addr %s190, 8
        %s192 = scalar_lea.vmem %s0, %s191
      $region20: #{multi_head_attention.4} parent=15 // pred_fallthru
        _
      // Predicated region
      $region21: #{multi_head_attention.4} parent=15 // pred_check
        %p193 = pneg %p91
      $region22: #{multi_head_attention.4} parent=15 // pred_check_branch
        %195 = sbr.rel (%p193) target = $region24
      $region23: #{multi_head_attention.4} parent=15 // pred_region
        %s196 = sadd.s32 %s17, 4
        %p197 = scmp.lt.s32.totalorder %s16, 1
        %s198 = scalar_select %p197, %s16, 1
        %p199 = scmp.lt.s32.totalorder %s19, 0
        %s200 = scalar_select %p199, %s19, 0
        %p201 = scmp.lt.s32.totalorder %s196, 11
        %s202 = scalar_select %p201, %s196, 11
        %s203 = smul.addr %s200, 12
        %s204 = sadd.s32 %s202, %s203
        %s205 = smul.addr %s198, 12
        %s206 = sadd.s32 %s204, %s205
        %s207 = smul.addr %s206, 8
        %s208 = scalar_lea.vmem %s1, %s207
        %s209 = sadd.s32 %s17, 4
      $region24: #{multi_head_attention.4} parent=15 // pred_fallthru
        _
      // Predicated region
      $region25: #{multi_head_attention.4} parent=15 // pred_check
        %p210 = pneg %p123
      $region26: #{multi_head_attention.4} parent=15 // pred_check_branch
        %212 = sbr.rel (%p210) target = $region28
      $region27: #{multi_head_attention.4} parent=15 // pred_region
        %s213 = sadd.s32 %s17, 8
        %p214 = scmp.lt.s32.totalorder %s16, 1
        %s215 = scalar_select %p214, %s16, 1
        %p216 = scmp.lt.s32.totalorder %s19, 0
        %s217 = scalar_select %p216, %s19, 0
        %p218 = scmp.lt.s32.totalorder %s213, 11
        %s219 = scalar_select %p218, %s213, 11
        %s220 = smul.addr %s217, 12
        %s221 = sadd.s32 %s219, %s220
        %s222 = smul.addr %s215, 12
        %s223 = sadd.s32 %s221, %s222
        %s224 = smul.addr %s223, 8
        %s225 = scalar_lea.vmem %s2, %s224
        %s226 = sadd.s32 %s17, 8
      $region28: #{multi_head_attention.4} parent=15 // pred_fallthru
        _
    $region16: #{multi_head_attention.4} parent=5 // pred_fallthru
      _
    %p227 = scmp.le.s32.totalorder 1, %s9
    %p228 = scmp.lt.s32.totalorder %s9, 9
    %p229 = pnand %p227, %p228
    %p230 = pneg %p229
    // Predicated region
    $region29: #{multi_head_attention.4} parent=5 // pred_check
      _
    $region30: #{multi_head_attention.4} parent=5 // pred_check_branch
      %232 = sbr.rel (%p229) target = $region32
    $region31: #{multi_head_attention.4} parent=5 // pred_region
      %s233 = ssub.s32 %s9, 1
      %p234 = scmp.lt.s32.totalorder %s20, 1
      %s235 = scalar_select %p234, %s20, 1
      %p236 = scmp.lt.s32.totalorder %s22, 0
      %s237 = scalar_select %p236, %s22, 0
      %p238 = scmp.lt.s32.totalorder %s21, 11
      %s239 = scalar_select %p238, %s21, 11
      %s240 = smul.addr %s237, 12
      %s241 = sadd.s32 %s239, %s240
      %s242 = smul.addr %s235, 12
      %s243 = sadd.s32 %s241, %s242
      %s244 = smul.addr %s243, 8
      %s245 = scalar_lea.vmem %s0, %s244
      %p246 = pneg %p65
      %p247 = pneg %p62
      %s248 = sadd.s32 %s21, 4
      %p249 = scmp.lt.s32.totalorder %s20, 1
      %s250 = scalar_select %p249, %s20, 1
      %p251 = scmp.lt.s32.totalorder %s23, 0
      %s252 = scalar_select %p251, %s23, 0
      %p253 = scmp.lt.s32.totalorder %s248, 11
      %s254 = scalar_select %p253, %s248, 11
      %s255 = smul.addr %s252, 12
      %s256 = sadd.s32 %s254, %s255
      %s257 = smul.addr %s250, 12
      %s258 = sadd.s32 %s256, %s257
      %s259 = smul.addr %s258, 8
      %s260 = scalar_lea.vmem %s1, %s259
      %p261 = pneg %p97
      %p262 = pneg %p94
      %s263 = sadd.s32 %s21, 8
      %p264 = scmp.lt.s32.totalorder %s20, 1
      %s265 = scalar_select %p264, %s20, 1
      %p266 = scmp.lt.s32.totalorder %s23, 0
      %s267 = scalar_select %p266, %s23, 0
      %p268 = scmp.lt.s32.totalorder %s263, 11
      %s269 = scalar_select %p268, %s263, 11
      %s270 = smul.addr %s267, 12
      %s271 = sadd.s32 %s269, %s270
      %s272 = smul.addr %s265, 12
      %s273 = sadd.s32 %s271, %s272
      %s274 = smul.addr %s273, 8
      %s275 = scalar_lea.vmem %s2, %s274
      %p276 = pneg %p129
      %p277 = pneg %p126
      %p278 = pneg %p159
      %p279 = pneg %p156
      %p280 = scmp.lt.s32.totalorder %s20, 1
      %s281 = scalar_select %p280, %s20, 1
      %p282 = scmp.lt.s32.totalorder %s22, 0
      %s283 = scalar_select %p282, %s22, 0
      %p284 = scmp.lt.s32.totalorder %s21, 3
      %s285 = scalar_select %p284, %s21, 3
      %s286 = smul.addr %s283, 4
      %s287 = sadd.s32 %s285, %s286
      %s288 = smul.addr %s281, 4
      %s289 = sadd.s32 %s287, %s288
      %s290 = smul.addr %s289, 8
      %s291 = scalar_lea.vmem %s3, %s290
      %p292 = scmp.lt.s32.totalorder %s20, 1
      %s293 = scalar_select %p292, %s20, 1
      %p294 = scmp.lt.s32.totalorder %s22, 0
      %s295 = scalar_select %p294, %s22, 0
      %p296 = scmp.lt.s32.totalorder %s21, 11
      %s297 = scalar_select %p296, %s21, 11
      %s298 = smul.addr %s295, 12
      %s299 = sadd.s32 %s297, %s298
      %s300 = smul.addr %s293, 12
      %s301 = sadd.s32 %s299, %s300
      %s302 = smul.addr %s301, 8
      %s303 = scalar_lea.vmem %s0, %s302
      %s304 = sadd.s32 %s21, 4
      %p305 = scmp.lt.s32.totalorder %s20, 1
      %s306 = scalar_select %p305, %s20, 1
      %p307 = scmp.lt.s32.totalorder %s23, 0
      %s308 = scalar_select %p307, %s23, 0
      %p309 = scmp.lt.s32.totalorder %s304, 11
      %s310 = scalar_select %p309, %s304, 11
      %s311 = smul.addr %s308, 12
      %s312 = sadd.s32 %s310, %s311
      %s313 = smul.addr %s306, 12
      %s314 = sadd.s32 %s312, %s313
      %s315 = smul.addr %s314, 8
      %s316 = scalar_lea.vmem %s1, %s315
      %s317 = sadd.s32 %s21, 4
      %s318 = sadd.s32 %s21, 8
      %p319 = scmp.lt.s32.totalorder %s20, 1
      %s320 = scalar_select %p319, %s20, 1
      %p321 = scmp.lt.s32.totalorder %s23, 0
      %s322 = scalar_select %p321, %s23, 0
      %p323 = scmp.lt.s32.totalorder %s318, 11
      %s324 = scalar_select %p323, %s318, 11
      %s325 = smul.addr %s322, 12
      %s326 = sadd.s32 %s324, %s325
      %s327 = smul.addr %s320, 12
      %s328 = sadd.s32 %s326, %s327
      %s329 = smul.addr %s328, 8
      %s330 = scalar_lea.vmem %s2, %s329
      %s331 = sadd.s32 %s21, 8
      %p332 = scmp.lt.s32.totalorder %s20, 1
      %s333 = scalar_select %p332, %s20, 1
      %p334 = scmp.lt.s32.totalorder %s22, 0
      %s335 = scalar_select %p334, %s22, 0
      %p336 = scmp.lt.s32.totalorder %s21, 3
      %s337 = scalar_select %p336, %s21, 3
      %s338 = smul.addr %s335, 4
      %s339 = sadd.s32 %s337, %s338
      %s340 = smul.addr %s333, 4
      %s341 = sadd.s32 %s339, %s340
      %s342 = smul.addr %s341, 8
      %s343 = scalar_lea.vmem %s3, %s342
      %p344 = scmp.eq.s32.totalorder %s23, 0
      // Predicated region
      $region33: #{multi_head_attention.4} parent=31 // pred_check
        %p345 = pneg %p344
      $region34: #{multi_head_attention.4} parent=31 // pred_check_branch
        %347 = sbr.rel (%p345) target = $region36
      $region35: #{multi_head_attention.4} parent=31 // pred_region
        %vm348 = vcmask 7168
        %349 = vst.msk [vmem:[#allocation2] sm:$0xff] %vm348, -1e+30
        %350 = vst.msk [vmem:[#allocation3] sm:$0xff] %vm348, 0.0
        %351 = vst [vmem:[#allocation4] sm:$0xff] 0.0
      $region36: #{multi_head_attention.4} parent=31 // pred_fallthru
        _
      %v352 = vld [vmem:[%s303] sm:$0xff]
      %v353 = vld [vmem:[%s316] sm:$0xff]
      %v354 = vld [vmem:[%s330] sm:$0xff]
      %355 = vmatprep.subr.mxu0 0.0
      %356 = vmatpush1.xpose.msra.mxu0 %v353
      %357 = vmatprep.subr.mxu0 0.0
      %358 = vmatpush1.xpose.msra.mxu0 0.0
      %359 = vmatprep.subr.mxu0 0.0
      %360 = vmatpush1.xpose.msra.mxu0 0.0
      %361 = vmatprep.subr.mxu0 0.0
      %362 = vmatpush1.xpose.msra.mxu0 0.0
      %363 = vmatprep.subr.mxu0 0.0
      %364 = vmatpush1.xpose.msra.mxu0 0.0
      %365 = vmatprep.subr.mxu0 0.0
      %366 = vmatpush1.xpose.msra.mxu0 0.0
      %367 = vmatprep.subr.mxu0 0.0
      %368 = vmatpush1.xpose.msra.mxu0 0.0
      %369 = vmatprep.subr.mxu0 0.0
      %370 = vmatpush1.xpose.msra.mxu0 0.0
      %371 = vmatprep.subr.mxu0 0.0
      %372 = vmatpush1.xpose.msra.mxu0 0.0
      %373 = vmatprep.subr.mxu0 0.0
      %374 = vmatpush1.xpose.msra.mxu0 0.0
      %375 = vmatprep.subr.mxu0 0.0
      %376 = vmatpush1.xpose.msra.mxu0 0.0
      %377 = vmatprep.subr.mxu0 0.0
      %378 = vmatpush1.xpose.msra.mxu0 0.0
      %379 = vmatprep.subr.mxu0 0.0
      %380 = vmatpush1.xpose.msra.mxu0 0.0
      %381 = vmatprep.subr.mxu0 0.0
      %382 = vmatpush1.xpose.msra.mxu0 0.0
      %383 = vmatprep.subr.mxu0 0.0
      %384 = vmatpush1.xpose.msra.mxu0 0.0
      %385 = vmatprep.subr.mxu0 0.0
      %386 = vmatpush1.xpose.msra.mxu0 0.0
      %387 = vmatprep.subr.mxu0 0.0
      %388 = vmatpush1.xpose.msra.mxu0 0.0
      %389 = vmatprep.subr.mxu0 0.0
      %390 = vmatpush1.xpose.msra.mxu0 0.0
      %391 = vmatprep.subr.mxu0 0.0
      %392 = vmatpush1.xpose.msra.mxu0 0.0
      %393 = vmatprep.subr.mxu0 0.0
      %394 = vmatpush1.xpose.msra.mxu0 0.0
      %395 = vmatprep.subr.mxu0 0.0
      %396 = vmatpush1.xpose.msra.mxu0 0.0
      %397 = vmatprep.subr.mxu0 0.0
      %398 = vmatpush1.xpose.msra.mxu0 0.0
      %399 = vmatprep.subr.mxu0 0.0
      %400 = vmatpush1.xpose.msra.mxu0 0.0
      %401 = vmatprep.subr.mxu0 0.0
      %402 = vmatpush1.xpose.msra.mxu0 0.0
      %403 = vmatprep.subr.mxu0 0.0
      %404 = vmatpush1.xpose.msra.mxu0 0.0
      %405 = vmatprep.subr.mxu0 0.0
      %406 = vmatpush1.xpose.msra.mxu0 0.0
      %407 = vmatprep.subr.mxu0 0.0
      %408 = vmatpush1.xpose.msra.mxu0 0.0
      %409 = vmatprep.subr.mxu0 0.0
      %410 = vmatpush1.xpose.msra.mxu0 0.0
      %411 = vmatprep.subr.mxu0 0.0
      %412 = vmatpush1.xpose.msra.mxu0 0.0
      %413 = vmatprep.subr.mxu0 0.0
      %414 = vmatpush1.xpose.msra.mxu0 0.0
      %415 = vmatprep.subr.mxu0 0.0
      %416 = vmatpush1.xpose.msra.mxu0 0.0
      %417 = vmatprep.subr.mxu0 0.0
      %418 = vmatpush1.xpose.msra.mxu0 0.0
      %419 = vmatprep.mubr.f32.mxu0 0.0
      %420 = vmatmul.mubr.f32.gmra.mrb[0].mxu0 %v352
      %v421 = vpop.f32.mrb[0].mxu0
      %v422 = vadd.f32 0.0, %v421
      %v423 = vpop.f32.mrb[0].mxu0
      %424 = vdwg.mxu0
      %v425 = vld [vmem:[#allocation2] sm:$0xff]
      %vm426 = vcmask 64512
      %v427 = vsel %vm426, %v422, -inf
      %428 = vmax.xlane.f32.xlu0 %v427
      %v429 = vpop.xlane.xlu0 %428
      %v430 = vmax.f32 %v425, %v429
      %v431 = vsub.f32 %v425, %v430
      %v432 = vmul.f32 %v431, 1.442695
      %v433 = vpow.pop %v432
      %435 = vset.pattern.permute.xlu0 0
      %436 = vperm.xlu0 %435, %v430
      %v437 = vpop.permute.xlu0 %436
      %v439 = vsub.f32 %v422, %v437
      %v440 = vmul.f32 %v439, 1.442695
      %v441 = vpow.pop %v440
      %v442 = vld [vmem:[#allocation3] sm:$0xff]
      %v443 = vmul.f32 %v433, %v442
      %v444 = vsel %vm426, %v441, 0.0
      %445 = vadd.xlane.f32.xlu0 %v444
      %v446 = vpop.xlane.xlu0 %445
      %v447 = vadd.f32 %v443, %v446
      %vm448 = vcmask 7168
      %449 = vst.msk [vmem:[#allocation3] sm:$0xff] %vm448, %v447
      %v450 = vld [vmem:[#allocation4] sm:$0xff]
      %452 = vset.pattern.permute.xlu0 0
      %453 = vperm.xlu0 %452, %v433
      %v454 = vpop.permute.xlu0 %453
      %v456 = vmul.f32 %v454, %v450
      %v458 = vsel %vm426, %v441, 0
      %460 = vmatprep.subr.mxu0 0.0
      %461 = vmatpush1.msra.mxu0 %v354
      %462 = vmatprep.subr.mxu0 0.0
      %463 = vmatpush1.msra.mxu0 0.0
      %464 = vmatprep.subr.mxu0 0.0
      %465 = vmatpush1.msra.mxu0 0.0
      %466 = vmatprep.subr.mxu0 0.0
      %467 = vmatpush1.msra.mxu0 0.0
      %468 = vmatprep.subr.mxu0 0.0
      %469 = vmatpush1.msra.mxu0 0.0
      %470 = vmatprep.subr.mxu0 0.0
      %471 = vmatpush1.msra.mxu0 0.0
      %472 = vmatprep.subr.mxu0 0.0
      %473 = vmatpush1.msra.mxu0 0.0
      %474 = vmatprep.subr.mxu0 0.0
      %475 = vmatpush1.msra.mxu0 0.0
      %476 = vmatprep.subr.mxu0 0.0
      %477 = vmatpush1.msra.mxu0 0.0
      %478 = vmatprep.subr.mxu0 0.0
      %479 = vmatpush1.msra.mxu0 0.0
      %480 = vmatprep.subr.mxu0 0.0
      %481 = vmatpush1.msra.mxu0 0.0
      %482 = vmatprep.subr.mxu0 0.0
      %483 = vmatpush1.msra.mxu0 0.0
      %484 = vmatprep.subr.mxu0 0.0
      %485 = vmatpush1.msra.mxu0 0.0
      %486 = vmatprep.subr.mxu0 0.0
      %487 = vmatpush1.msra.mxu0 0.0
      %488 = vmatprep.subr.mxu0 0.0
      %489 = vmatpush1.msra.mxu0 0.0
      %490 = vmatprep.subr.mxu0 0.0
      %491 = vmatpush1.msra.mxu0 0.0
      %492 = vmatprep.subr.mxu0 0.0
      %493 = vmatpush1.msra.mxu0 0.0
      %494 = vmatprep.subr.mxu0 0.0
      %495 = vmatpush1.msra.mxu0 0.0
      %496 = vmatprep.subr.mxu0 0.0
      %497 = vmatpush1.msra.mxu0 0.0
      %498 = vmatprep.subr.mxu0 0.0
      %499 = vmatpush1.msra.mxu0 0.0
      %500 = vmatprep.subr.mxu0 0.0
      %501 = vmatpush1.msra.mxu0 0.0
      %502 = vmatprep.subr.mxu0 0.0
      %503 = vmatpush1.msra.mxu0 0.0
      %504 = vmatprep.subr.mxu0 0.0
      %505 = vmatpush1.msra.mxu0 0.0
      %506 = vmatprep.subr.mxu0 0.0
      %507 = vmatpush1.msra.mxu0 0.0
      %508 = vmatprep.subr.mxu0 0.0
      %509 = vmatpush1.msra.mxu0 0.0
      %510 = vmatprep.subr.mxu0 0.0
      %511 = vmatpush1.msra.mxu0 0.0
      %512 = vmatprep.subr.mxu0 0.0
      %513 = vmatpush1.msra.mxu0 0.0
      %514 = vmatprep.subr.mxu0 0.0
      %515 = vmatpush1.msra.mxu0 0.0
      %516 = vmatprep.subr.mxu0 0.0
      %517 = vmatpush1.msra.mxu0 0.0
      %518 = vmatprep.subr.mxu0 0.0
      %519 = vmatpush1.msra.mxu0 0.0
      %520 = vmatprep.subr.mxu0 0.0
      %521 = vmatpush1.msra.mxu0 0.0
      %522 = vmatprep.subr.mxu0 0.0
      %523 = vmatpush1.msra.mxu0 0.0
      %524 = vmatprep.mubr.f32.mxu0 0.0
      %525 = vmatmul.mubr.f32.gmra.mrb[0].mxu0 %v458
      %v526 = vpop.f32.mrb[0].mxu0
      %v527 = vadd.f32 0.0, %v526
      %v528 = vpop.f32.mrb[0].mxu0
      %529 = vdwg.mxu0
      %v530 = vadd.f32 %v456, %v527
      %531 = vst [vmem:[#allocation4] sm:$0xff] %v530
      %532 = vst.msk [vmem:[#allocation2] sm:$0xff] %vm448, %v430
      // Predicated region
      $region37: #{multi_head_attention.4} parent=31 // pred_check
        %p533 = pneg %p344
      $region38: #{multi_head_attention.4} parent=31 // pred_check_branch
        %535 = sbr.rel (%p533) target = $region40
      $region39: #{multi_head_attention.4} parent=31 // pred_region
        %v536 = vld [vmem:[#allocation4] sm:$0xff]
        %v537 = vld [vmem:[#allocation3] sm:$0xff]
        %539 = vset.pattern.permute.xlu0 0
        %540 = vperm.xlu0 %539, %v537
        %v541 = vpop.permute.xlu0 %540
        %v543 = vrcp.pop %v541
        %v544 = vmul.f32 %v536, %v543
        %545 = vst [vmem:[%s343] sm:$0xff] %v544
      $region40: #{multi_head_attention.4} parent=31 // pred_fallthru
        _
      %p546 = scmp.lt.s32.totalorder %s20, 1
      %s547 = scalar_select %p546, %s20, 1
      %p548 = scmp.lt.s32.totalorder %s22, 0
      %s549 = scalar_select %p548, %s22, 0
      %p550 = scmp.lt.s32.totalorder %s21, 3
      %s551 = scalar_select %p550, %s21, 3
      %s552 = smul.addr %s549, 4
      %s553 = sadd.s32 %s551, %s552
      %s554 = smul.addr %s547, 4
      %s555 = sadd.s32 %s553, %s554
      %s556 = smul.addr %s555, 8
      %s557 = scalar_lea.vmem %s3, %s556
      // Predicated region
      $region41: #{multi_head_attention.4} parent=31 // pred_check
        %p558 = pneg %p156
      $region42: #{multi_head_attention.4} parent=31 // pred_check_branch
        %560 = sbr.rel (%p558) target = $region44
      $region43: #{multi_head_attention.4} parent=31 // pred_region
        _
      $region44: #{multi_head_attention.4} parent=31 // pred_fallthru
        _
    $region32: #{multi_head_attention.4} parent=5 // pred_fallthru
      _
    %p561 = scmp.le.s32.totalorder 2, %s9
    // Predicated region
    $region45: #{multi_head_attention.4} parent=5 // pred_check
      %p562 = pneg %p561
    $region46: #{multi_head_attention.4} parent=5 // pred_check_branch
      %564 = sbr.rel (%p562) target = $region48
    $region47: #{multi_head_attention.4} parent=5 // pred_region
      %s565 = ssub.s32 %s9, 2
      // Predicated region
      $region49: #{multi_head_attention.4} parent=47 // pred_check
        %p566 = pneg %p162
      $region50: #{multi_head_attention.4} parent=47 // pred_check_branch
        %568 = sbr.rel (%p566) target = $region52
      $region51: #{multi_head_attention.4} parent=47 // pred_region
        %p569 = scmp.lt.s32.totalorder %s24, 1
        %s570 = scalar_select %p569, %s24, 1
        %p571 = scmp.lt.s32.totalorder %s26, 0
        %s572 = scalar_select %p571, %s26, 0
        %p573 = scmp.lt.s32.totalorder %s25, 3
        %s574 = scalar_select %p573, %s25, 3
        %s575 = smul.addr %s572, 4
        %s576 = sadd.s32 %s574, %s575
        %s577 = smul.addr %s570, 4
        %s578 = sadd.s32 %s576, %s577
        %s579 = smul.addr %s578, 8
        %s580 = scalar_lea.vmem %s3, %s579
      $region52: #{multi_head_attention.4} parent=47 // pred_fallthru
        _
    $region48: #{multi_head_attention.4} parent=5 // pred_fallthru
      _
  $region6: #{multi_head_attention.4} parent=0 // loop_footer
    %s13 = sadd.s32 1, %s9
  $region7: #{multi_head_attention.4} parent=0 // loop_footer_branch
    %8 = sbr.rel target = $region3
  $region8: #{multi_head_attention.4} parent=0 // loop_exit
    _

// kernel: multi_head_attention.3
$region0: #{multi_head_attention.3}
  #allocation0 [shape = 'u32[]', space=smem, size = 0x4, offset = 0x4, fixed_abs, tag = 'smem constant byte address 0x4 - core index']
  #allocation1 [shape = 'u32[144,128]{1,0:T(1,128)}', space=vmem, size = 0x12000, scoped, tag = 'internal scratch']
  %s0 = inlined_call_operand.hbm [shape: f32[16,32], index: 0, kind: input, shape index: {}]
  %s1 = inlined_call_operand.hbm [shape: f32[32,1536], index: 1, kind: input, shape index: {}]
  %s2 = inlined_call_operand.hbm [shape: f32[1,1536], index: 2, kind: input, shape index: {}]
  %s3 = inlined_call_operand.vmem [shape: f32[16,1536], index: 3, kind: output, shape index: {}]
  %s4 = sld [smem:[#allocation0]]
  $region76: #{multi_head_attention.3} parent=0
    _
  %s6 = ssub.s32 1, %s4
  %s7 = scalar_select 0, %s6, %s4
  $region1: #{multi_head_attention.3} parent=0
    #allocation2 [shape = 'u8[8192]{0}', space=vmem, size = 0x2000, scoped, tag = 'input window, operand 0, single buffered']
    #allocation3 [shape = 's32[2]{0}', space=sflag, size = 0x8, scoped, tag = 'scoped memory for multi_head_attention.3']
    #allocation4 [shape = 'u8[131072]{0}', space=vmem, size = 0x20000, scoped, tag = 'input window, operand 1']
    #allocation5 [shape = 's32[2]{0}', space=sflag, size = 0x8, scoped, tag = 'scoped memory for multi_head_attention.3']
    #allocation6 [shape = 'u8[4096]{0}', space=vmem, size = 0x1000, scoped, tag = 'input window, operand 2']
    #allocation7 [shape = 'u8[65536]{0}', space=vmem, size = 0x10000, scoped, tag = 'output window, operand 0']
    %8 = vsyncpa [#allocation3], 0
    %9 = vsyncpa [#allocation5], 0
    %s10 = scalar_lea.sflag [#allocation5], 1
    %11 = vsyncpa %s10, 0
    loop: start=0, step=1, limit=5
    $region2: #{multi_head_attention.3} parent=1 // loop_pre_header
      _
    $region3: #{multi_head_attention.3} parent=1 // loop_header
      %s13 = sphi 0, %s17
      %p14 = scmp.ge.s32.totalorder %s13, 5
      %s20 = sphi 0, %s32
      %s21 = sphi 0, %s28
      %s22 = sphi 0, %s20
      %s23 = sphi 0, %s21
      %s24 = sphi 0, %s22
      %s25 = sphi 0, %s23
      %s35 = sphi 0, %s37
      %s38 = sphi 0, %s35
      %s39 = sphi 0, %s38
      %s55 = sphi 0, %s39
      %s61 = sphi 0, %s63
      %s64 = sphi 0, %s61
      %s65 = sphi 0, %s64
      %s81 = sphi 0, %s65
      %s87 = sphi 0, %s89
      %s90 = sphi 0, %s87
      %s91 = sphi 0, %s90
      %s107 = sphi 0, %s91
      %s115 = sphi 0, %s117
      %s118 = sphi 0, %s115
      %s119 = sphi 0, %s118
      %s135 = sphi 0, %s119
    $region4: #{multi_head_attention.3} parent=1 // loop_header_branch
      %16 = sbr.rel (%p14) target = $region8
    $region5: #{multi_head_attention.3} parent=1 // loop_body
      %s18 = ssub.s32 %s13, 1
      %s19 = ssub.s32 %s13, 2
      %s26 = sadd.s32 1, %s21
      %p27 = scmp.ge.s32.totalorder %s26, 3
      %s28 = scalar_select %p27, 0, %s26
      %s29 = sadd.s32 1, %s20
      %s30 = scalar_select %p27, %s29, %s20
      %p31 = scmp.ge.s32.totalorder %s30, 1
      %s32 = scalar_select %p31, 0, %s30
      %s33 = ssub.s32 %s20, %s32
      %p34 = scmp.eq.s32.totalorder %s33, 0
      %s36 = sadd.s32 %s35, 1
      %s37 = scalar_select %p34, %s35, %s36
      %p40 = pneg %p34
      %p41 = scmp.eq.s32.totalorder %s13, 2
      %p42 = por %p40, %p41
      %p43 = scmp.ne.s32.totalorder %s35, %s38
      %p44 = scmp.eq.s32.totalorder %s13, 0
      %p45 = por %p43, %p44
      %p46 = scmp.ne.s32.totalorder %s35, %s38
      %p47 = scmp.eq.s32.totalorder %s18, 2
      %p48 = por %p46, %p47
      %p49 = scmp.ne.s32.totalorder %s38, %s39
      %p50 = scmp.eq.s32.totalorder %s18, 0
      %p51 = por %p49, %p50
      %p52 = scmp.ne.s32.totalorder %s38, %s39
      %p53 = scmp.eq.s32.totalorder %s19, 2
      %p54 = por %p52, %p53
      %p56 = scmp.ne.s32.totalorder %s39, %s55
      %p57 = scmp.eq.s32.totalorder %s19, 0
      %p58 = por %p56, %p57
      %s59 = ssub.s32 %s21, %s28
      %p60 = scmp.eq.s32.totalorder %s59, 0
      %s62 = sadd.s32 %s61, 1
      %s63 = scalar_select %p60, %s61, %s62
      %p66 = pneg %p60
      %p67 = scmp.eq.s32.totalorder %s13, 2
      %p68 = por %p66, %p67
      %p69 = scmp.ne.s32.totalorder %s61, %s64
      %p70 = scmp.eq.s32.totalorder %s13, 0
      %p71 = por %p69, %p70
      %p72 = scmp.ne.s32.totalorder %s61, %s64
      %p73 = scmp.eq.s32.totalorder %s18, 2
      %p74 = por %p72, %p73
      %p75 = scmp.ne.s32.totalorder %s64, %s65
      %p76 = scmp.eq.s32.totalorder %s18, 0
      %p77 = por %p75, %p76
      %p78 = scmp.ne.s32.totalorder %s64, %s65
      %p79 = scmp.eq.s32.totalorder %s19, 2
      %p80 = por %p78, %p79
      %p82 = scmp.ne.s32.totalorder %s65, %s81
      %p83 = scmp.eq.s32.totalorder %s19, 0
      %p84 = por %p82, %p83
      %s85 = ssub.s32 %s21, %s28
      %p86 = scmp.eq.s32.totalorder %s85, 0
      %s88 = sadd.s32 %s87, 1
      %s89 = scalar_select %p86, %s87, %s88
      %p92 = pneg %p86
      %p93 = scmp.eq.s32.totalorder %s13, 2
      %p94 = por %p92, %p93
      %p95 = scmp.ne.s32.totalorder %s87, %s90
      %p96 = scmp.eq.s32.totalorder %s13, 0
      %p97 = por %p95, %p96
      %p98 = scmp.ne.s32.totalorder %s87, %s90
      %p99 = scmp.eq.s32.totalorder %s18, 2
      %p100 = por %p98, %p99
      %p101 = scmp.ne.s32.totalorder %s90, %s91
      %p102 = scmp.eq.s32.totalorder %s18, 0
      %p103 = por %p101, %p102
      %p104 = scmp.ne.s32.totalorder %s90, %s91
      %p105 = scmp.eq.s32.totalorder %s19, 2
      %p106 = por %p104, %p105
      %p108 = scmp.ne.s32.totalorder %s91, %s107
      %p109 = scmp.eq.s32.totalorder %s19, 0
      %p110 = por %p108, %p109
      %s111 = ssub.s32 %s20, %s32
      %s112 = ssub.s32 %s21, %s28
      %s113 = sor.u32 %s111, %s112
      %p114 = scmp.eq.s32.totalorder %s113, 0
      %s116 = sadd.s32 %s115, 1
      %s117 = scalar_select %p114, %s115, %s116
      %p120 = pneg %p114
      %p121 = scmp.eq.s32.totalorder %s13, 2
      %p122 = por %p120, %p121
      %p123 = scmp.ne.s32.totalorder %s115, %s118
      %p124 = scmp.eq.s32.totalorder %s13, 0
      %p125 = por %p123, %p124
      %p126 = scmp.ne.s32.totalorder %s115, %s118
      %p127 = scmp.eq.s32.totalorder %s18, 2
      %p128 = por %p126, %p127
      %p129 = scmp.ne.s32.totalorder %s118, %s119
      %p130 = scmp.eq.s32.totalorder %s18, 0
      %p131 = por %p129, %p130
      %p132 = scmp.ne.s32.totalorder %s118, %s119
      %p133 = scmp.eq.s32.totalorder %s19, 2
      %p134 = por %p132, %p133
      %p136 = scmp.ne.s32.totalorder %s119, %s135
      %p137 = scmp.eq.s32.totalorder %s19, 0
      %p138 = por %p136, %p137
      %p139 = scmp.le.s32.totalorder 1, %s13
      %p140 = scmp.lt.s32.totalorder %s13, 4
      %p141 = pnand %p139, %p140
      %p142 = pneg %p141
      // Predicated region
      $region9: #{multi_head_attention.3} parent=5 // pred_check
        _
      $region10: #{multi_head_attention.3} parent=5 // pred_check_branch
        %144 = sbr.rel (%p141) target = $region12
      $region11: #{multi_head_attention.3} parent=5 // pred_region
        %s145 = ssub.s32 %s13, 1
        // Predicated region
        $region13: #{multi_head_attention.3} parent=11 // pred_check
          %p146 = pneg %p51
        $region14: #{multi_head_attention.3} parent=11 // pred_check_branch
          %148 = sbr.rel (%p146) target = $region16
        $region15: #{multi_head_attention.3} parent=11 // pred_region
          %s149 = smul.u32 2, %s22
          %s151 = ssub.s32 256, 256
          %152 = vsyncadd [#allocation3], %s151
          %s153 = smul.addr %s149, 128
          %s154 = scalar_lea.hbm %s0, %s153
          %s155 = sshll.u32 [#allocation2], 4
          %s156 = int_to_ptr.vmem [resolvable:$true] %s155
          %161 = dma.hbm_to_vmem [thread:$0]  %s154, 256, %s156, [#allocation3], 128, 128, 8
        $region16: #{multi_head_attention.3} parent=11 // pred_fallthru
          _
      $region12: #{multi_head_attention.3} parent=5 // pred_fallthru
        _
      %p162 = scmp.lt.s32.totalorder %s13, 3
      // Predicated region
      $region17: #{multi_head_attention.3} parent=5 // pred_check
        %p163 = pneg %p162
      $region18: #{multi_head_attention.3} parent=5 // pred_check_branch
        %165 = sbr.rel (%p163) target = $region20
      $region19: #{multi_head_attention.3} parent=5 // pred_region
        // Predicated region
        $region21: #{multi_head_attention.3} parent=19 // pred_check
          %p166 = pneg %p71
        $region22: #{multi_head_attention.3} parent=19 // pred_check_branch
          %168 = sbr.rel (%p166) target = $region24
        $region23: #{multi_head_attention.3} parent=19 // pred_region
          %s169 = sand.u32 %s13, 1
          %s170 = scalar_lea.sflag [#allocation5], %s169
          %s171 = sand.u32 %s61, 1
          %s172 = smul.addr %s171, 128
          %s173 = scalar_lea.vmem [#allocation4], %s172
          %s174 = smul.u32 4, %s21
          %s176 = ssub.s32 2048, 2048
          %177 = vsyncadd %s170, %s176
          %s178 = smul.addr %s174, 128
          %s179 = scalar_lea.hbm %s1, %s178
          %s180 = sshll.u32 %s173, 4
          %s181 = int_to_ptr.vmem [resolvable:$true] %s180
          %186 = dma.hbm_to_vmem [thread:$0]  %s179, 2048, %s181, %s170, 1536, 512, 32
        $region24: #{multi_head_attention.3} parent=19 // pred_fallthru
          _
        // Predicated region
        $region25: #{multi_head_attention.3} parent=19 // pred_check
          %p187 = pneg %p97
        $region26: #{multi_head_attention.3} parent=19 // pred_check_branch
          %189 = sbr.rel (%p187) target = $region28
        $region27: #{multi_head_attention.3} parent=19 // pred_region
          %s190 = sand.u32 %s13, 1
          %s191 = scalar_lea.sflag [#allocation5], %s190
          %s192 = sand.u32 %s87, 1
          %s193 = smul.addr %s192, 4
          %s194 = scalar_lea.vmem [#allocation6], %s193
          %s195 = smul.u32 4, %s21
          %s197 = ssub.s32 64, 64
          %198 = vsyncadd %s191, %s197
          %s199 = smul.addr %s195, 16
          %s200 = scalar_lea.hbm %s2, %s199
          %s202 = sshll.u32 %s194, 4
          %s203 = int_to_ptr.vmem [resolvable:$true] %s202
          %205 = dma.hbm_to_vmem [thread:$0]  %s200, 64, %s203, %s191
        $region28: #{multi_head_attention.3} parent=19 // pred_fallthru
          _
      $region20: #{multi_head_attention.3} parent=5 // pred_fallthru
        _
      %p206 = scmp.le.s32.totalorder 1, %s13
      %p207 = scmp.lt.s32.totalorder %s13, 4
      %p208 = pnand %p206, %p207
      %p209 = pneg %p208
      // Predicated region
      $region29: #{multi_head_attention.3} parent=5 // pred_check
        _
      $region30: #{multi_head_attention.3} parent=5 // pred_check_branch
        %211 = sbr.rel (%p208) target = $region32
      $region31: #{multi_head_attention.3} parent=5 // pred_region
        %s212 = ssub.s32 %s13, 1
        // Predicated region
        $region33: #{multi_head_attention.3} parent=31 // pred_check
          %p213 = pneg %p51
        $region34: #{multi_head_attention.3} parent=31 // pred_check_branch
          %215 = sbr.rel (%p213) target = $region36
        $region35: #{multi_head_attention.3} parent=31 // pred_region
          %216 = dma.done [#allocation3], 256
        $region36: #{multi_head_attention.3} parent=31 // pred_fallthru
          _
        %s217 = sand.u32 %s18, 1
        %s218 = scalar_lea.sflag [#allocation5], %s217
        %s219 = sand.u32 %s64, 1
        %s220 = smul.addr %s219, 128
        %s221 = scalar_lea.vmem [#allocation4], %s220
        // Predicated region
        $region37: #{multi_head_attention.3} parent=31 // pred_check
          %p222 = pneg %p77
        $region38: #{multi_head_attention.3} parent=31 // pred_check_branch
          %224 = sbr.rel (%p222) target = $region40
        $region39: #{multi_head_attention.3} parent=31 // pred_region
          %225 = dma.done %s218, 2048
        $region40: #{multi_head_attention.3} parent=31 // pred_fallthru
          _
        %s226 = sand.u32 %s18, 1
        %s227 = scalar_lea.sflag [#allocation5], %s226
        %s228 = sand.u32 %s90, 1
        %s229 = smul.addr %s228, 4
        %s230 = scalar_lea.vmem [#allocation6], %s229
        // Predicated region
        $region41: #{multi_head_attention.3} parent=31 // pred_check
          %p231 = pneg %p103
        $region42: #{multi_head_attention.3} parent=31 // pred_check_branch
          %233 = sbr.rel (%p231) target = $region44
        $region43: #{multi_head_attention.3} parent=31 // pred_region
          %234 = dma.done %s227, 64
        $region44: #{multi_head_attention.3} parent=31 // pred_fallthru
          _
        %p235 = pneg %p51
        %p236 = pneg %p48
        %s237 = sand.u32 %s18, 1
        %s238 = scalar_lea.sflag [#allocation5], %s237
        %s239 = sand.u32 %s64, 1
        %s240 = smul.addr %s239, 128
        %s241 = scalar_lea.vmem [#allocation4], %s240
        %p242 = pneg %p77
        %p243 = pneg %p74
        %s244 = sand.u32 %s18, 1
        %s245 = scalar_lea.sflag [#allocation5], %s244
        %s246 = sand.u32 %s90, 1
        %s247 = smul.addr %s246, 4
        %s248 = scalar_lea.vmem [#allocation6], %s247
        %p249 = pneg %p103
        %p250 = pneg %p100
        %p251 = pneg %p131
        %p252 = pneg %p128
        %s253 = sand.u32 %s118, 1
        %s254 = sand.u32 %s118, 1
        %s255 = smul.addr %s254, 64
        %s256 = scalar_lea.vmem [#allocation7], %s255
        %s257 = smul.u32 2, %s22
        %s258 = smul.u32 4, %s23
        %s259 = smul.u32 4, %s23
        %s260 = smul.u32 2, %s22
        %s261 = smul.u32 4, %s23
        %v262 = vld [vmem:[#allocation2] sm:$0xff]
        %v263 = vld [vmem:[#allocation2 + $0x8] sm:$0xff]
        %v264 = vld [vmem:[%s221] sm:$0xff]
        %v265 = vld [vmem:[%s221 + $0x8] sm:$0xff]
        %v266 = vld [vmem:[%s221 + $0x10] sm:$0xff]
        %v267 = vld [vmem:[%s221 + $0x18] sm:$0xff]
        %v268 = vld [vmem:[%s221 + $0x20] sm:$0xff]
        %v269 = vld [vmem:[%s221 + $0x28] sm:$0xff]
        %v270 = vld [vmem:[%s221 + $0x30] sm:$0xff]
        %v271 = vld [vmem:[%s221 + $0x38] sm:$0xff]
        %v272 = vld [vmem:[%s221 + $0x40] sm:$0xff]
        %v273 = vld [vmem:[%s221 + $0x48] sm:$0xff]
        %v274 = vld [vmem:[%s221 + $0x50] sm:$0xff]
        %v275 = vld [vmem:[%s221 + $0x58] sm:$0xff]
        %v276 = vld [vmem:[%s221 + $0x60] sm:$0xff]
        %v277 = vld [vmem:[%s221 + $0x68] sm:$0xff]
        %v278 = vld [vmem:[%s221 + $0x70] sm:$0xff]
        %v279 = vld [vmem:[%s221 + $0x78] sm:$0xff]
        %v280 = vld [vmem:[%s230] sm:$0xf]
        %v282 = vlaneseq
        %v283 = vshrl.u32 %v282, 7
        %v284 = vsub.s32 0, %v283
        %v285 = vrot.slane %v280, %v284
        %v286 = vlaneseq
        %v287 = vshrl.u32 %v286, 7
        %v288 = vsub.s32 1, %v287
        %v289 = vrot.slane %v280, %v288
        %v290 = vlaneseq
        %v291 = vshrl.u32 %v290, 7
        %v292 = vsub.s32 2, %v291
        %v293 = vrot.slane %v280, %v292
        %v294 = vlaneseq
        %v295 = vshrl.u32 %v294, 7
        %v296 = vsub.s32 3, %v295
        %v297 = vrot.slane %v280, %v296
        %vm302 = vcmask 261120
        %v304 = vsel %vm302, %v262, 0
        %v307 = vsel %vm302, %v263, 0
        %309 = vmatprep.subr.mxu0 %v265
        %310 = vmatpush1.msra.mxu0 %v264
        %311 = vmatprep.subr.mxu0 %v269
        %312 = vmatpush1.msra.mxu0 %v268
        %313 = vmatprep.subr.mxu0 %v273
        %314 = vmatpush1.msra.mxu0 %v272
        %315 = vmatprep.subr.mxu0 %v277
        %316 = vmatpush1.msra.mxu0 %v276
        %317 = vmatprep.subr.mxu0 0.0
        %318 = vmatpush1.msra.mxu0 0.0
        %319 = vmatprep.subr.mxu0 0.0
        %320 = vmatpush1.msra.mxu0 0.0
        %321 = vmatprep.subr.mxu0 0.0
        %322 = vmatpush1.msra.mxu0 0.0
        %323 = vmatprep.subr.mxu0 0.0
        %324 = vmatpush1.msra.mxu0 0.0
        %325 = vmatprep.subr.mxu0 0.0
        %326 = vmatpush1.msra.mxu0 0.0
        %327 = vmatprep.subr.mxu0 0.0
        %328 = vmatpush1.msra.mxu0 0.0
        %329 = vmatprep.subr.mxu0 0.0
        %330 = vmatpush1.msra.mxu0 0.0
        %331 = vmatprep.subr.mxu0 0.0
        %332 = vmatpush1.msra.mxu0 0.0
        %333 = vmatprep.subr.mxu0 0.0
        %334 = vmatpush1.msra.mxu0 0.0
        %335 = vmatprep.subr.mxu0 0.0
        %336 = vmatpush1.msra.mxu0 0.0
        %337 = vmatprep.subr.mxu0 0.0
        %338 = vmatpush1.msra.mxu0 0.0
        %339 = vmatprep.subr.mxu0 0.0
        %340 = vmatpush1.msra.mxu0 0.0
        %341 = vmatprep.subr.mxu0 0.0
        %342 = vmatpush1.msra.mxu0 0.0
        %343 = vmatprep.subr.mxu0 0.0
        %344 = vmatpush1.msra.mxu0 0.0
        %345 = vmatprep.subr.mxu0 0.0
        %346 = vmatpush1.msra.mxu0 0.0
        %347 = vmatprep.subr.mxu0 0.0
        %348 = vmatpush1.msra.mxu0 0.0
        %349 = vmatprep.subr.mxu0 0.0
        %350 = vmatpush1.msra.mxu0 0.0
        %351 = vmatprep.subr.mxu0 0.0
        %352 = vmatpush1.msra.mxu0 0.0
        %353 = vmatprep.subr.mxu0 0.0
        %354 = vmatpush1.msra.mxu0 0.0
        %355 = vmatprep.subr.mxu0 0.0
        %356 = vmatpush1.msra.mxu0 0.0
        %357 = vmatprep.subr.mxu0 0.0
        %358 = vmatpush1.msra.mxu0 0.0
        %359 = vmatprep.subr.mxu0 0.0
        %360 = vmatpush1.msra.mxu0 0.0
        %361 = vmatprep.subr.mxu0 0.0
        %362 = vmatpush1.msra.mxu0 0.0
        %363 = vmatprep.subr.mxu0 0.0
        %364 = vmatpush1.msra.mxu0 0.0
        %365 = vmatprep.subr.mxu0 0.0
        %366 = vmatpush1.msra.mxu0 0.0
        %367 = vmatprep.subr.mxu0 0.0
        %368 = vmatpush1.msra.mxu0 0.0
        %369 = vmatprep.subr.mxu0 0.0
        %370 = vmatpush1.msra.mxu0 0.0
        %371 = vmatprep.subr.mxu0 0.0
        %372 = vmatpush1.msra.mxu0 0.0
        %373 = vmatprep.mubr.f32.mxu0 0.0
        %374 = vmatmul.mubr.f32.gmra.mrb[0].mxu0 %v304
        %v375 = vpop.f32.mrb[0].mxu0
        %v376 = vadd.f32 %v285, %v375
        %v377 = vpop.f32.mrb[0].mxu0
        %v378 = vadd.f32 %v289, %v377
        %379 = vmatprep.mubr.f32.mxu0 0.0
        %380 = vmatmul.mubr.f32.gmra.mrb[0].mxu0 %v307
        %v381 = vpop.f32.mrb[0].mxu0
        %v382 = vadd.f32 %v285, %v381
        %v383 = vpop.f32.mrb[0].mxu0
        %v384 = vadd.f32 %v289, %v383
        %385 = vdwg.mxu0
        %386 = vmatprep.subr.mxu0 %v267
        %387 = vmatpush1.msra.mxu0 %v266
        %388 = vmatprep.subr.mxu0 %v271
        %389 = vmatpush1.msra.mxu0 %v270
        %390 = vmatprep.subr.mxu0 %v275
        %391 = vmatpush1.msra.mxu0 %v274
        %392 = vmatprep.subr.mxu0 %v279
        %393 = vmatpush1.msra.mxu0 %v278
        %394 = vmatprep.subr.mxu0 0.0
        %395 = vmatpush1.msra.mxu0 0.0
        %396 = vmatprep.subr.mxu0 0.0
        %397 = vmatpush1.msra.mxu0 0.0
        %398 = vmatprep.subr.mxu0 0.0
        %399 = vmatpush1.msra.mxu0 0.0
        %400 = vmatprep.subr.mxu0 0.0
        %401 = vmatpush1.msra.mxu0 0.0
        %402 = vmatprep.subr.mxu0 0.0
        %403 = vmatpush1.msra.mxu0 0.0
        %404 = vmatprep.subr.mxu0 0.0
        %405 = vmatpush1.msra.mxu0 0.0
        %406 = vmatprep.subr.mxu0 0.0
        %407 = vmatpush1.msra.mxu0 0.0
        %408 = vmatprep.subr.mxu0 0.0
        %409 = vmatpush1.msra.mxu0 0.0
        %410 = vmatprep.subr.mxu0 0.0
        %411 = vmatpush1.msra.mxu0 0.0
        %412 = vmatprep.subr.mxu0 0.0
        %413 = vmatpush1.msra.mxu0 0.0
        %414 = vmatprep.subr.mxu0 0.0
        %415 = vmatpush1.msra.mxu0 0.0
        %416 = vmatprep.subr.mxu0 0.0
        %417 = vmatpush1.msra.mxu0 0.0
        %418 = vmatprep.subr.mxu0 0.0
        %419 = vmatpush1.msra.mxu0 0.0
        %420 = vmatprep.subr.mxu0 0.0
        %421 = vmatpush1.msra.mxu0 0.0
        %422 = vmatprep.subr.mxu0 0.0
        %423 = vmatpush1.msra.mxu0 0.0
        %424 = vmatprep.subr.mxu0 0.0
        %425 = vmatpush1.msra.mxu0 0.0
        %426 = vmatprep.subr.mxu0 0.0
        %427 = vmatpush1.msra.mxu0 0.0
        %428 = vmatprep.subr.mxu0 0.0
        %429 = vmatpush1.msra.mxu0 0.0
        %430 = vmatprep.subr.mxu0 0.0
        %431 = vmatpush1.msra.mxu0 0.0
        %432 = vmatprep.subr.mxu0 0.0
        %433 = vmatpush1.msra.mxu0 0.0
        %434 = vmatprep.subr.mxu0 0.0
        %435 = vmatpush1.msra.mxu0 0.0
        %436 = vmatprep.subr.mxu0 0.0
        %437 = vmatpush1.msra.mxu0 0.0
        %438 = vmatprep.subr.mxu0 0.0
        %439 = vmatpush1.msra.mxu0 0.0
        %440 = vmatprep.subr.mxu0 0.0
        %441 = vmatpush1.msra.mxu0 0.0
        %442 = vmatprep.subr.mxu0 0.0
        %443 = vmatpush1.msra.mxu0 0.0
        %444 = vmatprep.subr.mxu0 0.0
        %445 = vmatpush1.msra.mxu0 0.0
        %446 = vmatprep.subr.mxu0 0.0
        %447 = vmatpush1.msra.mxu0 0.0
        %448 = vmatprep.subr.mxu0 0.0
        %449 = vmatpush1.msra.mxu0 0.0
        %450 = vmatprep.mubr.f32.mxu0 0.0
        %451 = vmatmul.mubr.f32.gmra.mrb[0].mxu0 %v304
        %v452 = vpop.f32.mrb[0].mxu0
        %v453 = vadd.f32 %v293, %v452
        %v454 = vpop.f32.mrb[0].mxu0
        %v455 = vadd.f32 %v297, %v454
        %456 = vmatprep.mubr.f32.mxu0 0.0
        %457 = vmatmul.mubr.f32.gmra.mrb[0].mxu0 %v307
        %v458 = vpop.f32.mrb[0].mxu0
        %v459 = vadd.f32 %v293, %v458
        %v460 = vpop.f32.mrb[0].mxu0
        %v461 = vadd.f32 %v297, %v460
        %462 = vdwg.mxu0
        %463 = vst [vmem:[%s256] sm:$0xff] %v376
        %464 = vst [vmem:[%s256 + $0x8] sm:$0xff] %v378
        %465 = vst [vmem:[%s256 + $0x10] sm:$0xff] %v453
        %466 = vst [vmem:[%s256 + $0x18] sm:$0xff] %v455
        %467 = vst [vmem:[%s256 + $0x20] sm:$0xff] %v382
        %468 = vst [vmem:[%s256 + $0x28] sm:$0xff] %v384
        %469 = vst [vmem:[%s256 + $0x30] sm:$0xff] %v459
        %470 = vst [vmem:[%s256 + $0x38] sm:$0xff] %v461
        %s471 = sand.u32 %s118, 1
        %s472 = sand.u32 %s118, 1
        %s473 = smul.addr %s472, 64
        %s474 = scalar_lea.vmem [#allocation7], %s473
        // Predicated region
        $region45: #{multi_head_attention.3} parent=31 // pred_check
          %p475 = pneg %p128
        $region46: #{multi_head_attention.3} parent=31 // pred_check_branch
          %477 = sbr.rel (%p475) target = $region48
        $region47: #{multi_head_attention.3} parent=31 // pred_region
          %s478 = smul.u32 2, %s22
          %s479 = smul.u32 4, %s23
          %s480 = smul.addr %s478, 12
          %s481 = sadd.s32 %s479, %s480
          %s482 = smul.addr %s481, 8
          %s483 = scalar_lea.vmem %s3, %s482
          // Predicated region
          $region49: #{multi_head_attention.3} parent=47 // pred_check
            _
          $region50: #{multi_head_attention.3} parent=47 // pred_check_branch
            %485 = sbr.rel (0) target = $region52
          $region51: #{multi_head_attention.3} parent=47 // pred_region
            // Predicated region
            $region53: #{multi_head_attention.3} parent=51 // pred_check
              _
            $region54: #{multi_head_attention.3} parent=51 // pred_check_branch
              %487 = sbr.rel (0) target = $region56
            $region55: #{multi_head_attention.3} parent=51 // pred_region
              loop: start=0, step=1, limit=1
              $region57: #{multi_head_attention.3} parent=55 // loop_pre_header
                _
              $region58: #{multi_head_attention.3} parent=55 // loop_header
                %s489 = sphi 0, %s493
                %p490 = scmp.ge.s32.totalorder %s489, 1
                %s494 = sphi %s474, %s474
                %s495 = sphi %s483, %s483
              $region59: #{multi_head_attention.3} parent=55 // loop_header_branch
                %492 = sbr.rel (%p490) target = $region63
              $region60: #{multi_head_attention.3} parent=55 // loop_body
                %v496 = vld [vmem:[%s494] sm:$0xff]
                %497 = vst [vmem:[%s495] sm:$0xff] %v496
                %v498 = vld [vmem:[%s494 + $0x8] sm:$0xff]
                %499 = vst [vmem:[%s495 + $0x8] sm:$0xff] %v498
                %v500 = vld [vmem:[%s494 + $0x10] sm:$0xff]
                %501 = vst [vmem:[%s495 + $0x10] sm:$0xff] %v500
                %v502 = vld [vmem:[%s494 + $0x18] sm:$0xff]
                %503 = vst [vmem:[%s495 + $0x18] sm:$0xff] %v502
                %v504 = vld [vmem:[%s494 + $0x20] sm:$0xff]
                %505 = vst [vmem:[%s495 + $0x60] sm:$0xff] %v504
                %v506 = vld [vmem:[%s494 + $0x28] sm:$0xff]
                %507 = vst [vmem:[%s495 + $0x68] sm:$0xff] %v506
                %v508 = vld [vmem:[%s494 + $0x30] sm:$0xff]
                %509 = vst [vmem:[%s495 + $0x70] sm:$0xff] %v508
                %v510 = vld [vmem:[%s494 + $0x38] sm:$0xff]
                %511 = vst [vmem:[%s495 + $0x78] sm:$0xff] %v510
              $region61: #{multi_head_attention.3} parent=55 // loop_footer
                %s493 = sadd.s32 1, %s489
              $region62: #{multi_head_attention.3} parent=55 // loop_footer_branch
                %488 = sbr.rel target = $region58
              $region63: #{multi_head_attention.3} parent=55 // loop_exit
                _
            $region56: #{multi_head_attention.3} parent=51 // pred_fallthru
              _
            // Predicated region
            $region64: #{multi_head_attention.3} parent=51 // pred_check
              _
            $region65: #{multi_head_attention.3} parent=51 // pred_check_branch
              %513 = sbr.rel target = $region67
            $region66: #{multi_head_attention.3} parent=51 // pred_region
              _
            $region67: #{multi_head_attention.3} parent=51 // pred_fallthru
              _
          $region52: #{multi_head_attention.3} parent=47 // pred_fallthru
            _
          %514 = vnop
        $region48: #{multi_head_attention.3} parent=31 // pred_fallthru
          _
      $region32: #{multi_head_attention.3} parent=5 // pred_fallthru
        _
      %p515 = scmp.le.s32.totalorder 2, %s13
      // Predicated region
      $region68: #{multi_head_attention.3} parent=5 // pred_check
        %p516 = pneg %p515
      $region69: #{multi_head_attention.3} parent=5 // pred_check_branch
        %518 = sbr.rel (%p516) target = $region71
      $region70: #{multi_head_attention.3} parent=5 // pred_region
        %s519 = ssub.s32 %s13, 2
        // Predicated region
        $region72: #{multi_head_attention.3} parent=70 // pred_check
          %p520 = pneg %p134
        $region73: #{multi_head_attention.3} parent=70 // pred_check_branch
          %522 = sbr.rel (%p520) target = $region75
        $region74: #{multi_head_attention.3} parent=70 // pred_region
          %s523 = sand.u32 %s119, 1
          %s524 = sand.u32 %s119, 1
          %s525 = smul.addr %s524, 64
          %s526 = scalar_lea.vmem [#allocation7], %s525
        $region75: #{multi_head_attention.3} parent=70 // pred_fallthru
          _
      $region71: #{multi_head_attention.3} parent=5 // pred_fallthru
        _
    $region6: #{multi_head_attention.3} parent=1 // loop_footer
      %s17 = sadd.s32 1, %s13
    $region7: #{multi_head_attention.3} parent=1 // loop_footer_branch
      %12 = sbr.rel target = $region3
    $region8: #{multi_head_attention.3} parent=1 // loop_exit
      _
    %527 = vsyncpa [#allocation3], 1
    %s528 = scalar_lea.sflag [#allocation3], 1
    %529 = vsyncpa %s528, 1
    %530 = vsyncpa [#allocation5], 1
    %s531 = scalar_lea.sflag [#allocation5], 1
    %532 = vsyncpa %s531, 1

// kernel: multi_head_attention.5
$region0: #{multi_head_attention.5}
  #allocation0 [shape = 'u32[]', space=smem, size = 0x4, offset = 0x4, fixed_abs, tag = 'smem constant byte address 0x4 - core index']
  #allocation1 [shape = 'u32[144,128]{1,0:T(1,128)}', space=vmem, size = 0x12000, scoped, tag = 'internal scratch']
  %s0 = inlined_call_operand.vmem [shape: f32[16,512], index: 0, kind: input, shape index: {}]
  %s1 = inlined_call_operand.vmem [shape: f32[512,32], index: 1, kind: input, shape index: {}]
  %s2 = inlined_call_operand.vmem [shape: f32[1,32], index: 2, kind: input, shape index: {}]
  %s3 = inlined_call_operand.hbm [shape: f32[16,32], index: 3, kind: output, shape index: {}]
  %s4 = sld [smem:[#allocation0]]
  $region22: #{multi_head_attention.5} parent=0
    _
  %s6 = ssub.s32 1, %s4
  %s7 = scalar_select 0, %s6, %s4
  $region1: #{multi_head_attention.5} parent=0
    #allocation2 [shape = 'u8[8192]{0}', space=vmem, size = 0x2000, scoped, tag = 'output window, operand 0, single buffered']
    #allocation3 [shape = 's32[1]{0}', space=sflag, size = 0x4, scoped, tag = 'scoped memory for multi_head_attention.5']
    %8 = vsyncpa [#allocation3], 0
    // Predicated region
    $region2: #{multi_head_attention.5} parent=1 // pred_check
      _
    $region3: #{multi_head_attention.5} parent=1 // pred_check_branch
      %10 = sbr.rel (0) target = $region5
    $region4: #{multi_head_attention.5} parent=1 // pred_region
      _
    $region5: #{multi_head_attention.5} parent=1 // pred_fallthru
      _
    // Predicated region
    $region6: #{multi_head_attention.5} parent=1 // pred_check
      _
    $region7: #{multi_head_attention.5} parent=1 // pred_check_branch
      %12 = sbr.rel (0) target = $region9
    $region8: #{multi_head_attention.5} parent=1 // pred_region
      _
    $region9: #{multi_head_attention.5} parent=1 // pred_fallthru
      _
    // Predicated region
    $region10: #{multi_head_attention.5} parent=1 // pred_check
      _
    $region11: #{multi_head_attention.5} parent=1 // pred_check_branch
      %14 = sbr.rel (0) target = $region13
    $region12: #{multi_head_attention.5} parent=1 // pred_region
      _
    $region13: #{multi_head_attention.5} parent=1 // pred_fallthru
      _
    %v15 = vld [vmem:[%s0] sm:$0xff]
    %v16 = vld [vmem:[%s0 + $0x8] sm:$0xff]
    %v17 = vld [vmem:[%s0 + $0x10] sm:$0xff]
    %v18 = vld [vmem:[%s0 + $0x18] sm:$0xff]
    %v19 = vld [vmem:[%s0 + $0x20] sm:$0xff]
    %v20 = vld [vmem:[%s0 + $0x28] sm:$0xff]
    %v21 = vld [vmem:[%s0 + $0x30] sm:$0xff]
    %v22 = vld [vmem:[%s0 + $0x38] sm:$0xff]
    %v23 = vld [vmem:[%s1] sm:$0xff]
    %v24 = vld [vmem:[%s1 + $0x8] sm:$0xff]
    %v25 = vld [vmem:[%s1 + $0x10] sm:$0xff]
    %v26 = vld [vmem:[%s1 + $0x18] sm:$0xff]
    %v27 = vld [vmem:[%s1 + $0x20] sm:$0xff]
    %v28 = vld [vmem:[%s1 + $0x28] sm:$0xff]
    %v29 = vld [vmem:[%s1 + $0x30] sm:$0xff]
    %v30 = vld [vmem:[%s1 + $0x38] sm:$0xff]
    %v31 = vld [vmem:[%s1 + $0x40] sm:$0xff]
    %v32 = vld [vmem:[%s1 + $0x48] sm:$0xff]
    %v33 = vld [vmem:[%s1 + $0x50] sm:$0xff]
    %v34 = vld [vmem:[%s1 + $0x58] sm:$0xff]
    %v35 = vld [vmem:[%s1 + $0x60] sm:$0xff]
    %v36 = vld [vmem:[%s1 + $0x68] sm:$0xff]
    %v37 = vld [vmem:[%s1 + $0x70] sm:$0xff]
    %v38 = vld [vmem:[%s1 + $0x78] sm:$0xff]
    %v39 = vld [vmem:[%s1 + $0x80] sm:$0xff]
    %v40 = vld [vmem:[%s1 + $0x88] sm:$0xff]
    %v41 = vld [vmem:[%s1 + $0x90] sm:$0xff]
    %v42 = vld [vmem:[%s1 + $0x98] sm:$0xff]
    %v43 = vld [vmem:[%s1 + $0xa0] sm:$0xff]
    %v44 = vld [vmem:[%s1 + $0xa8] sm:$0xff]
    %v45 = vld [vmem:[%s1 + $0xb0] sm:$0xff]
    %v46 = vld [vmem:[%s1 + $0xb8] sm:$0xff]
    %v47 = vld [vmem:[%s1 + $0xc0] sm:$0xff]
    %v48 = vld [vmem:[%s1 + $0xc8] sm:$0xff]
    %v49 = vld [vmem:[%s1 + $0xd0] sm:$0xff]
    %v50 = vld [vmem:[%s1 + $0xd8] sm:$0xff]
    %v51 = vld [vmem:[%s1 + $0xe0] sm:$0xff]
    %v52 = vld [vmem:[%s1 + $0xe8] sm:$0xff]
    %v53 = vld [vmem:[%s1 + $0xf0] sm:$0xff]
    %v54 = vld [vmem:[%s1 + $0xf8] sm:$0xff]
    %v55 = vld [vmem:[%s1 + $0x100] sm:$0xff]
    %v56 = vld [vmem:[%s1 + $0x108] sm:$0xff]
    %v57 = vld [vmem:[%s1 + $0x110] sm:$0xff]
    %v58 = vld [vmem:[%s1 + $0x118] sm:$0xff]
    %v59 = vld [vmem:[%s1 + $0x120] sm:$0xff]
    %v60 = vld [vmem:[%s1 + $0x128] sm:$0xff]
    %v61 = vld [vmem:[%s1 + $0x130] sm:$0xff]
    %v62 = vld [vmem:[%s1 + $0x138] sm:$0xff]
    %v63 = vld [vmem:[%s1 + $0x140] sm:$0xff]
    %v64 = vld [vmem:[%s1 + $0x148] sm:$0xff]
    %v65 = vld [vmem:[%s1 + $0x150] sm:$0xff]
    %v66 = vld [vmem:[%s1 + $0x158] sm:$0xff]
    %v67 = vld [vmem:[%s1 + $0x160] sm:$0xff]
    %v68 = vld [vmem:[%s1 + $0x168] sm:$0xff]
    %v69 = vld [vmem:[%s1 + $0x170] sm:$0xff]
    %v70 = vld [vmem:[%s1 + $0x178] sm:$0xff]
    %v71 = vld [vmem:[%s1 + $0x180] sm:$0xff]
    %v72 = vld [vmem:[%s1 + $0x188] sm:$0xff]
    %v73 = vld [vmem:[%s1 + $0x190] sm:$0xff]
    %v74 = vld [vmem:[%s1 + $0x198] sm:$0xff]
    %v75 = vld [vmem:[%s1 + $0x1a0] sm:$0xff]
    %v76 = vld [vmem:[%s1 + $0x1a8] sm:$0xff]
    %v77 = vld [vmem:[%s1 + $0x1b0] sm:$0xff]
    %v78 = vld [vmem:[%s1 + $0x1b8] sm:$0xff]
    %v79 = vld [vmem:[%s1 + $0x1c0] sm:$0xff]
    %v80 = vld [vmem:[%s1 + $0x1c8] sm:$0xff]
    %v81 = vld [vmem:[%s1 + $0x1d0] sm:$0xff]
    %v82 = vld [vmem:[%s1 + $0x1d8] sm:$0xff]
    %v83 = vld [vmem:[%s1 + $0x1e0] sm:$0xff]
    %v84 = vld [vmem:[%s1 + $0x1e8] sm:$0xff]
    %v85 = vld [vmem:[%s1 + $0x1f0] sm:$0xff]
    %v86 = vld [vmem:[%s1 + $0x1f8] sm:$0xff]
    %v87 = vld [vmem:[%s2] sm:$0x1]
    %v89 = vlaneseq
    %v90 = vshrl.u32 %v89, 7
    %v91 = vsub.s32 0, %v90
    %v92 = vrot.slane %v87, %v91
    %94 = vmatprep.subr.mxu0 0.0
    %95 = vmatpush1.msra.mxu0 %v23
    %96 = vmatprep.subr.mxu0 0.0
    %97 = vmatpush1.msra.mxu0 %v24
    %98 = vmatprep.subr.mxu0 0.0
    %99 = vmatpush1.msra.mxu0 %v25
    %100 = vmatprep.subr.mxu0 0.0
    %101 = vmatpush1.msra.mxu0 %v26
    %102 = vmatprep.subr.mxu0 0.0
    %103 = vmatpush1.msra.mxu0 %v27
    %104 = vmatprep.subr.mxu0 0.0
    %105 = vmatpush1.msra.mxu0 %v28
    %106 = vmatprep.subr.mxu0 0.0
    %107 = vmatpush1.msra.mxu0 %v29
    %108 = vmatprep.subr.mxu0 0.0
    %109 = vmatpush1.msra.mxu0 %v30
    %110 = vmatprep.subr.mxu0 0.0
    %111 = vmatpush1.msra.mxu0 %v31
    %112 = vmatprep.subr.mxu0 0.0
    %113 = vmatpush1.msra.mxu0 %v32
    %114 = vmatprep.subr.mxu0 0.0
    %115 = vmatpush1.msra.mxu0 %v33
    %116 = vmatprep.subr.mxu0 0.0
    %117 = vmatpush1.msra.mxu0 %v34
    %118 = vmatprep.subr.mxu0 0.0
    %119 = vmatpush1.msra.mxu0 %v35
    %120 = vmatprep.subr.mxu0 0.0
    %121 = vmatpush1.msra.mxu0 %v36
    %122 = vmatprep.subr.mxu0 0.0
    %123 = vmatpush1.msra.mxu0 %v37
    %124 = vmatprep.subr.mxu0 0.0
    %125 = vmatpush1.msra.mxu0 %v38
    %126 = vmatprep.subr.mxu0 0.0
    %127 = vmatpush1.msra.mxu0 %v39
    %128 = vmatprep.subr.mxu0 0.0
    %129 = vmatpush1.msra.mxu0 %v40
    %130 = vmatprep.subr.mxu0 0.0
    %131 = vmatpush1.msra.mxu0 %v41
    %132 = vmatprep.subr.mxu0 0.0
    %133 = vmatpush1.msra.mxu0 %v42
    %134 = vmatprep.subr.mxu0 0.0
    %135 = vmatpush1.msra.mxu0 %v43
    %136 = vmatprep.subr.mxu0 0.0
    %137 = vmatpush1.msra.mxu0 %v44
    %138 = vmatprep.subr.mxu0 0.0
    %139 = vmatpush1.msra.mxu0 %v45
    %140 = vmatprep.subr.mxu0 0.0
    %141 = vmatpush1.msra.mxu0 %v46
    %142 = vmatprep.subr.mxu0 0.0
    %143 = vmatpush1.msra.mxu0 %v47
    %144 = vmatprep.subr.mxu0 0.0
    %145 = vmatpush1.msra.mxu0 %v48
    %146 = vmatprep.subr.mxu0 0.0
    %147 = vmatpush1.msra.mxu0 %v49
    %148 = vmatprep.subr.mxu0 0.0
    %149 = vmatpush1.msra.mxu0 %v50
    %150 = vmatprep.subr.mxu0 0.0
    %151 = vmatpush1.msra.mxu0 %v51
    %152 = vmatprep.subr.mxu0 0.0
    %153 = vmatpush1.msra.mxu0 %v52
    %154 = vmatprep.subr.mxu0 0.0
    %155 = vmatpush1.msra.mxu0 %v53
    %156 = vmatprep.subr.mxu0 0.0
    %157 = vmatpush1.msra.mxu0 %v54
    %158 = vmatprep.mubr.f32.mxu0 %v16
    %159 = vmatmul.mubr.f32.gmra.mrb[0].mxu0 %v15
    %v160 = vpop.f32.mrb[0].mxu0
    %v161 = vadd.f32 %v92, %v160
    %v162 = vpop.f32.mrb[0].mxu0
    %163 = vmatprep.mubr.f32.mxu0 %v20
    %164 = vmatmul.mubr.f32.gmra.mrb[0].mxu0 %v19
    %v165 = vpop.f32.mrb[0].mxu0
    %v166 = vadd.f32 %v92, %v165
    %v167 = vpop.f32.mrb[0].mxu0
    %168 = vdwg.mxu0
    %169 = vmatprep.subr.mxu0 0.0
    %170 = vmatpush1.msra.mxu0 %v55
    %171 = vmatprep.subr.mxu0 0.0
    %172 = vmatpush1.msra.mxu0 %v56
    %173 = vmatprep.subr.mxu0 0.0
    %174 = vmatpush1.msra.mxu0 %v57
    %175 = vmatprep.subr.mxu0 0.0
    %176 = vmatpush1.msra.mxu0 %v58
    %177 = vmatprep.subr.mxu0 0.0
    %178 = vmatpush1.msra.mxu0 %v59
    %179 = vmatprep.subr.mxu0 0.0
    %180 = vmatpush1.msra.mxu0 %v60
    %181 = vmatprep.subr.mxu0 0.0
    %182 = vmatpush1.msra.mxu0 %v61
    %183 = vmatprep.subr.mxu0 0.0
    %184 = vmatpush1.msra.mxu0 %v62
    %185 = vmatprep.subr.mxu0 0.0
    %186 = vmatpush1.msra.mxu0 %v63
    %187 = vmatprep.subr.mxu0 0.0
    %188 = vmatpush1.msra.mxu0 %v64
    %189 = vmatprep.subr.mxu0 0.0
    %190 = vmatpush1.msra.mxu0 %v65
    %191 = vmatprep.subr.mxu0 0.0
    %192 = vmatpush1.msra.mxu0 %v66
    %193 = vmatprep.subr.mxu0 0.0
    %194 = vmatpush1.msra.mxu0 %v67
    %195 = vmatprep.subr.mxu0 0.0
    %196 = vmatpush1.msra.mxu0 %v68
    %197 = vmatprep.subr.mxu0 0.0
    %198 = vmatpush1.msra.mxu0 %v69
    %199 = vmatprep.subr.mxu0 0.0
    %200 = vmatpush1.msra.mxu0 %v70
    %201 = vmatprep.subr.mxu0 0.0
    %202 = vmatpush1.msra.mxu0 %v71
    %203 = vmatprep.subr.mxu0 0.0
    %204 = vmatpush1.msra.mxu0 %v72
    %205 = vmatprep.subr.mxu0 0.0
    %206 = vmatpush1.msra.mxu0 %v73
    %207 = vmatprep.subr.mxu0 0.0
    %208 = vmatpush1.msra.mxu0 %v74
    %209 = vmatprep.subr.mxu0 0.0
    %210 = vmatpush1.msra.mxu0 %v75
    %211 = vmatprep.subr.mxu0 0.0
    %212 = vmatpush1.msra.mxu0 %v76
    %213 = vmatprep.subr.mxu0 0.0
    %214 = vmatpush1.msra.mxu0 %v77
    %215 = vmatprep.subr.mxu0 0.0
    %216 = vmatpush1.msra.mxu0 %v78
    %217 = vmatprep.subr.mxu0 0.0
    %218 = vmatpush1.msra.mxu0 %v79
    %219 = vmatprep.subr.mxu0 0.0
    %220 = vmatpush1.msra.mxu0 %v80
    %221 = vmatprep.subr.mxu0 0.0
    %222 = vmatpush1.msra.mxu0 %v81
    %223 = vmatprep.subr.mxu0 0.0
    %224 = vmatpush1.msra.mxu0 %v82
    %225 = vmatprep.subr.mxu0 0.0
    %226 = vmatpush1.msra.mxu0 %v83
    %227 = vmatprep.subr.mxu0 0.0
    %228 = vmatpush1.msra.mxu0 %v84
    %229 = vmatprep.subr.mxu0 0.0
    %230 = vmatpush1.msra.mxu0 %v85
    %231 = vmatprep.subr.mxu0 0.0
    %232 = vmatpush1.msra.mxu0 %v86
    %233 = vmatprep.mubr.f32.mxu0 %v18
    %234 = vmatmul.mubr.f32.gmra.mrb[0].mxu0 %v17
    %v235 = vpop.f32.mrb[0].mxu0
    %v236 = vadd.f32 %v161, %v235
    %v237 = vpop.f32.mrb[0].mxu0
    %238 = vmatprep.mubr.f32.mxu0 %v22
    %239 = vmatmul.mubr.f32.gmra.mrb[0].mxu0 %v21
    %v240 = vpop.f32.mrb[0].mxu0
    %v241 = vadd.f32 %v166, %v240
    %v242 = vpop.f32.mrb[0].mxu0
    %243 = vdwg.mxu0
    %vm244 = vcmask 261120
    %245 = vst.msk [vmem:[#allocation2] sm:$0xff] %vm244, %v236
    %246 = vst.msk [vmem:[#allocation2 + $0x8] sm:$0xff] %vm244, %v241
    // Predicated region
    $region14: #{multi_head_attention.5} parent=1 // pred_check
      _
    $region15: #{multi_head_attention.5} parent=1 // pred_check_branch
      %248 = sbr.rel (0) target = $region17
    $region16: #{multi_head_attention.5} parent=1 // pred_region
      %s250 = ssub.s32 256, 256
      %251 = vsyncadd [#allocation3], %s250
      %s252 = sshll.u32 [#allocation2], 4
      %s253 = int_to_ptr.vmem [resolvable:$true] %s252
      %258 = dma.vmem_to_hbm [thread:$0]  %s253, 256, %s3, [#allocation3], 128, 128, 8
    $region17: #{multi_head_attention.5} parent=1 // pred_fallthru
      _
    // Predicated region
    $region18: #{multi_head_attention.5} parent=1 // pred_check
      _
    $region19: #{multi_head_attention.5} parent=1 // pred_check_branch
      %260 = sbr.rel (0) target = $region21
    $region20: #{multi_head_attention.5} parent=1 // pred_region
      %261 = dma.done [#allocation3], 256
    $region21: #{multi_head_attention.5} parent=1 // pred_fallthru
      _
    %262 = vsyncpa [#allocation3], 1

</llo_original>
